<compile_context>
chip_gen: v7x
topology: tpu7x:2x2x1
jax: 0.10.0
libtpu: 0.0.40
codegen_flags: <defaults>
</compile_context>

<pallas_src>
import functools
import math

import jax
import jax.numpy as jnp
from jax.experimental import pallas as pl
from jax.experimental.pallas import tpu as pltpu


def _flash_mha_kernel(q_ref, k_ref, v_ref, o_ref, m_ref, l_ref, acc_ref, *,
                      num_heads, head_dim, scale):
    """One (batch, q_tile) block; online softmax over the KV grid axis.

    q_ref: (1, tq, E)   k_ref/v_ref: (1, tkv, E)   o_ref: (1, tq, E)
    m_ref/l_ref: (H, tq, 1) f32 scratch   acc_ref: (tq, E) f32 scratch
    """
    ki = pl.program_id(2)

    @pl.when(ki == 0)
    def _init():
        m_ref[...] = jnp.full(m_ref.shape, -jnp.inf, dtype=jnp.float32)
        l_ref[...] = jnp.zeros(l_ref.shape, dtype=jnp.float32)
        acc_ref[...] = jnp.zeros(acc_ref.shape, dtype=jnp.float32)

    # Fold the 1/sqrt(head_dim) scale into q (touches tq*E elements, not tq*tkv).
    q = q_ref[0] * jnp.asarray(scale, dtype=q_ref.dtype)   # (tq, E)
    k = k_ref[0]                                            # (tkv, E)
    v = v_ref[0]                                            # (tkv, E)

    # Static unrolled loop over heads; each head is a contiguous E-axis slice.
    for h in range(num_heads):
        sl = slice(h * head_dim, (h + 1) * head_dim)
        qh = q[:, sl]                                       # (tq, D)
        kh = k[:, sl]                                       # (tkv, D)
        vh = v[:, sl]                                       # (tkv, D)

        # scores = (q*scale) @ k^T  -> (tq, tkv), f32 accumulation on the MXU.
        s = jax.lax.dot_general(
            qh, kh,
            dimension_numbers=(((1,), (1,)), ((), ())),
            preferred_element_type=jnp.float32,
        )

        m_prev = m_ref[h]                                   # (tq, 1)
        m_cur = jnp.max(s, axis=-1, keepdims=True)          # (tq, 1)
        m_new = jnp.maximum(m_prev, m_cur)
        alpha = jnp.exp(m_prev - m_new)                     # (tq, 1)
        p = jnp.exp(s - m_new)                              # (tq, tkv)

        l_ref[h] = alpha * l_ref[h] + jnp.sum(p, axis=-1, keepdims=True)
        acc_ref[:, sl] = alpha * acc_ref[:, sl] + jnp.dot(
            p.astype(vh.dtype), vh, preferred_element_type=jnp.float32)
        m_ref[h] = m_new

    @pl.when(ki == pl.num_programs(2) - 1)
    def _finalize():
        # Normalize each head and emit one lane-dense (tq, E) store.
        parts = []
        for h in range(num_heads):
            sl = slice(h * head_dim, (h + 1) * head_dim)
            inv = pl.reciprocal(l_ref[h], approx=False)     # (tq, 1)
            parts.append(acc_ref[:, sl] * inv)
        o_ref[0] = jnp.concatenate(parts, axis=-1).astype(o_ref.dtype)


def _pick_tile(size, target):
    """Largest divisor of `size` that is <= target and a multiple of 8, else `size`."""
    if size <= target:
        return size
    for t in range(target, 7, -1):
        if size % t == 0 and t % 8 == 0:
            return t
    return size


def multihead_attention(query, key, value, *, num_heads, q_tile=256, kv_tile=512):
    """query: (B, Sq, E), key/value: (B, Skv, E) -> (B, Sq, E).

    Dropout p=0.0 (identity).  For v5e, consider smaller kv_tile (128-aligned);
    defaults fit comfortably in the 32 MiB scoped VMEM of v6e/v7x.
    """
    B, Sq, E = query.shape
    Bk, Skv, Ek = key.shape
    Bv, Sv, Ev = value.shape
    assert Bk == B and Bv == B, "batch dims must match"
    assert Ek == E and Ev == E, "embed dims must match"
    assert Sv == Skv, "key/value seq lens must match"
    assert E % num_heads == 0, "embed_dim must be divisible by num_heads"
    D = E // num_heads
    scale = 1.0 / math.sqrt(D)

    tq = _pick_tile(Sq, q_tile)
    tkv = _pick_tile(Skv, kv_tile)
    grid = (B, Sq // tq, Skv // tkv)

    kernel = functools.partial(
        _flash_mha_kernel, num_heads=num_heads, head_dim=D, scale=scale)

    # TODO(synk): stateful dropout (p > 0) not implemented; module uses p = 0.0.
    out = pl.pallas_call(
        kernel,
        out_shape=jax.ShapeDtypeStruct((B, Sq, E), query.dtype),
        grid_spec=pltpu.PrefetchScalarGridSpec(
            num_scalar_prefetch=0,
            grid=grid,
            in_specs=[
                pl.BlockSpec((1, tq, E), lambda b, qi, ki: (b, qi, 0)),
                pl.BlockSpec((1, tkv, E), lambda b, qi, ki: (b, ki, 0)),
                pl.BlockSpec((1, tkv, E), lambda b, qi, ki: (b, ki, 0)),
            ],
            out_specs=pl.BlockSpec((1, tq, E), lambda b, qi, ki: (b, qi, 0)),
            scratch_shapes=[
                pltpu.VMEM((num_heads, tq, 1), jnp.float32),   # running max
                pltpu.VMEM((num_heads, tq, 1), jnp.float32),   # running sum
                pltpu.VMEM((tq, E), jnp.float32),              # output accumulator
            ],
        ),
        compiler_params=pltpu.CompilerParams(
            dimension_semantics=("parallel", "parallel", "arbitrary")),
    )(query, key, value)
    return out


def _reference(query, key, value, num_heads):
    B, Sq, E = query.shape
    Skv = key.shape[1]
    D = E // num_heads
    q = query.reshape(B, Sq, num_heads, D).transpose(0, 2, 1, 3)
    k = key.reshape(B, Skv, num_heads, D).transpose(0, 2, 1, 3)
    v = value.reshape(B, Skv, num_heads, D).transpose(0, 2, 1, 3)
    s = jnp.einsum("bhqd,bhkd->bhqk", q, k) / math.sqrt(D)
    s = s - jnp.max(s, axis=-1, keepdims=True)
    w = jax.nn.softmax(s, axis=-1)
    o = jnp.einsum("bhqk,bhkd->bhqd", w, v)
    return o.transpose(0, 2, 1, 3).reshape(B, Sq, E)


if __name__ == "__main__":
    batch, seq, embed_dim, num_heads = 2, 8, 32, 4

    key0 = jax.random.PRNGKey(0)
    kq, kk, kv = jax.random.split(key0, 3)
    query = jax.random.normal(kq, (batch, seq, embed_dim), dtype=jnp.float32)
    key_ = jax.random.normal(kk, (batch, seq, embed_dim), dtype=jnp.float32)
    value = jax.random.normal(kv, (batch, seq, embed_dim), dtype=jnp.float32)

    out = multihead_attention(query, key_, value, num_heads=num_heads)
    out = jax.block_until_ready(out)
    ref = _reference(query, key_, value, num_heads)
    assert out.shape == (batch, seq, embed_dim)
    assert jnp.allclose(out, ref, atol=1e-5, rtol=1e-5)

    # Second small case exercising the multi-tile (online-softmax) path: qi/ki > 1.
    seq2 = 32
    kq2, kk2, kv2 = jax.random.split(jax.random.PRNGKey(1), 3)
    q2 = jax.random.normal(kq2, (batch, seq2, embed_dim), dtype=jnp.float32)
    k2 = jax.random.normal(kk2, (batch, seq2, embed_dim), dtype=jnp.float32)
    v2 = jax.random.normal(kv2, (batch, seq2, embed_dim), dtype=jnp.float32)
    out2 = multihead_attention(q2, k2, v2, num_heads=num_heads,
                               q_tile=16, kv_tile=16)
    out2 = jax.block_until_ready(out2)
    ref2 = _reference(q2, k2, v2, num_heads)
    assert jnp.allclose(out2, ref2, atol=1e-5, rtol=1e-5)

    print("KERNEL_OK")
</pallas_src>

<mosaic_0001>
module attributes {stable_mosaic.version = 11 : i64} {
  func.func @_flash_mha_kernel(%arg0: i32, %arg1: i32, %arg2: i32, %arg3: memref<1x8x32xf32, #tpu.memory_space<vmem>>, %arg4: memref<1x8x32xf32, #tpu.memory_space<vmem>>, %arg5: memref<1x8x32xf32, #tpu.memory_space<vmem>>, %arg6: memref<1x8x32xf32, #tpu.memory_space<vmem>>, %arg7: memref<4x8x1xf32, #tpu.memory_space<vmem>>, %arg8: memref<4x8x1xf32, #tpu.memory_space<vmem>>, %arg9: memref<8x32xf32, #tpu.memory_space<vmem>>) attributes {dimension_semantics = [#tpu.dimension_semantics<parallel>, #tpu.dimension_semantics<parallel>, #tpu.dimension_semantics<arbitrary>], iteration_bounds = array<i64: 2, 1, 1>, scalar_prefetch = 0 : i64, scratch_operands = 3 : i64, tpu.core_type = #tpu.core_type<tc>, window_params = [{transform_indices = @transform_0, window_bounds = array<i64: 1, 8, 32>}, {transform_indices = @transform_1, window_bounds = array<i64: 1, 8, 32>}, {transform_indices = @transform_2, window_bounds = array<i64: 1, 8, 32>}, {transform_indices = @transform_3, window_bounds = array<i64: 1, 8, 32>}]} {
    %c0_i32 = arith.constant 0 : i32
    %0 = arith.cmpi eq, %arg2, %c0_i32 : i32
    %1 = arith.extui %0 : i1 to i32
    %c0_i32_0 = arith.constant 0 : i32
    %2 = arith.cmpi ne, %1, %c0_i32_0 : i32
    scf.if %2 {
      %cst_85 = arith.constant 0xFF800000 : f32
      %142 = vector.broadcast %cst_85 : f32 to vector<4x8x1xf32>
      %c0_86 = arith.constant 0 : index
      %c0_87 = arith.constant 0 : index
      %c0_88 = arith.constant 0 : index
      %143 = vector.load %arg7[%c0_86, %c0_87, %c0_88] : memref<4x8x1xf32, #tpu.memory_space<vmem>>, vector<4x8x1xf32>
      tpu.vector_store %arg7[%c0_86, %c0_87, %c0_88], %142 {strides = array<i32>} : memref<4x8x1xf32, #tpu.memory_space<vmem>>, vector<4x8x1xf32>,
      %cst_89 = arith.constant 0.000000e+00 : f32
      %144 = vector.broadcast %cst_89 : f32 to vector<4x8x1xf32>
      %c0_90 = arith.constant 0 : index
      %c0_91 = arith.constant 0 : index
      %c0_92 = arith.constant 0 : index
      %145 = vector.load %arg8[%c0_90, %c0_91, %c0_92] : memref<4x8x1xf32, #tpu.memory_space<vmem>>, vector<4x8x1xf32>
      tpu.vector_store %arg8[%c0_90, %c0_91, %c0_92], %144 {strides = array<i32>} : memref<4x8x1xf32, #tpu.memory_space<vmem>>, vector<4x8x1xf32>,
      %cst_93 = arith.constant 0.000000e+00 : f32
      %146 = vector.broadcast %cst_93 : f32 to vector<8x32xf32>
      %c0_94 = arith.constant 0 : index
      %c0_95 = arith.constant 0 : index
      %147 = vector.load %arg9[%c0_94, %c0_95] : memref<8x32xf32, #tpu.memory_space<vmem>>, vector<8x32xf32>
      tpu.vector_store %arg9[%c0_94, %c0_95], %146 {strides = array<i32>} : memref<8x32xf32, #tpu.memory_space<vmem>>, vector<8x32xf32>,
    } else {
    }
    %c0 = arith.constant 0 : index
    %c0_1 = arith.constant 0 : index
    %c0_2 = arith.constant 0 : index
    %3 = vector.load %arg3[%c0, %c0_1, %c0_2] : memref<1x8x32xf32, #tpu.memory_space<vmem>>, vector<1x8x32xf32>
    %4 = vector.shape_cast %3 : vector<1x8x32xf32> to vector<8x32xf32>
    %cst = arith.constant 0.353553385 : f32
    %5 = vector.broadcast %cst : f32 to vector<8x32xf32>
    %6 = arith.mulf %4, %5 : vector<8x32xf32>
    %c0_3 = arith.constant 0 : index
    %c0_4 = arith.constant 0 : index
    %c0_5 = arith.constant 0 : index
    %7 = vector.load %arg4[%c0_3, %c0_4, %c0_5] : memref<1x8x32xf32, #tpu.memory_space<vmem>>, vector<1x8x32xf32>
    %8 = vector.shape_cast %7 : vector<1x8x32xf32> to vector<8x32xf32>
    %c0_6 = arith.constant 0 : index
    %c0_7 = arith.constant 0 : index
    %c0_8 = arith.constant 0 : index
    %9 = vector.load %arg5[%c0_6, %c0_7, %c0_8] : memref<1x8x32xf32, #tpu.memory_space<vmem>>, vector<1x8x32xf32>
    %10 = vector.shape_cast %9 : vector<1x8x32xf32> to vector<8x32xf32>
    %11 = vector.extract_strided_slice %6 {offsets = [0, 0], sizes = [8, 8], strides = [1, 1]} : vector<8x32xf32> to vector<8x8xf32>
    %12 = vector.extract_strided_slice %8 {offsets = [0, 0], sizes = [8, 8], strides = [1, 1]} : vector<8x32xf32> to vector<8x8xf32>
    %13 = vector.extract_strided_slice %10 {offsets = [0, 0], sizes = [8, 8], strides = [1, 1]} : vector<8x32xf32> to vector<8x8xf32>
    %cst_9 = arith.constant dense<0.000000e+00> : vector<8x8xf32>
    %14 = tpu.matmul %11, %12, %cst_9 {dimension_numbers = #tpu.dot_dimension_numbers<[1], [1], [0], [0], [0, 0, 1, 0], [], []>} : vector<8x8xf32>, vector<8x8xf32>, vector<8x8xf32> -> vector<8x8xf32>
    %c0_10 = arith.constant 0 : index
    %c0_11 = arith.constant 0 : index
    %c0_12 = arith.constant 0 : index
    %15 = vector.load %arg7[%c0_10, %c0_11, %c0_12] : memref<4x8x1xf32, #tpu.memory_space<vmem>>, vector<1x8x1xf32>
    %16 = vector.shape_cast %15 : vector<1x8x1xf32> to vector<8x1xf32>
    %cst_13 = arith.constant dense<0xFF800000> : vector<8xf32>
    %17 = vector.multi_reduction <maximumf>, %14, %cst_13 [1] : vector<8x8xf32> to vector<8xf32>
    %18 = vector.shape_cast %17 : vector<8xf32> to vector<8x1xf32>
    %19 = arith.maximumf %16, %18 : vector<8x1xf32>
    %20 = arith.subf %16, %19 : vector<8x1xf32>
    %21 = math.exp %20 : vector<8x1xf32>
    %22 = vector.broadcast %19 : vector<8x1xf32> to vector<8x8xf32>
    %23 = arith.subf %14, %22 : vector<8x8xf32>
    %24 = math.exp %23 : vector<8x8xf32>
    %c0_14 = arith.constant 0 : index
    %c0_15 = arith.constant 0 : index
    %c0_16 = arith.constant 0 : index
    %25 = vector.load %arg8[%c0_14, %c0_15, %c0_16] : memref<4x8x1xf32, #tpu.memory_space<vmem>>, vector<1x8x1xf32>
    %26 = vector.shape_cast %25 : vector<1x8x1xf32> to vector<8x1xf32>
    %27 = arith.mulf %21, %26 : vector<8x1xf32>
    %cst_17 = arith.constant dense<0.000000e+00> : vector<8xf32>
    %28 = vector.multi_reduction <add>, %24, %cst_17 [1] : vector<8x8xf32> to vector<8xf32>
    %29 = vector.shape_cast %28 : vector<8xf32> to vector<8x1xf32>
    %30 = arith.addf %27, %29 : vector<8x1xf32>
    %c0_18 = arith.constant 0 : index
    %c0_19 = arith.constant 0 : index
    %c0_20 = arith.constant 0 : index
    %31 = vector.load %arg8[%c0_18, %c0_19, %c0_20] : memref<4x8x1xf32, #tpu.memory_space<vmem>>, vector<1x8x1xf32>
    %32 = vector.shape_cast %31 : vector<1x8x1xf32> to vector<8x1xf32>
    %33 = vector.shape_cast %30 : vector<8x1xf32> to vector<1x8x1xf32>
    tpu.vector_store %arg8[%c0_18, %c0_19, %c0_20], %33 {strides = array<i32>} : memref<4x8x1xf32, #tpu.memory_space<vmem>>, vector<1x8x1xf32>,
    %c0_21 = arith.constant 0 : index
    %c0_22 = arith.constant 0 : index
    %34 = vector.load %arg9[%c0_21, %c0_22] : memref<8x32xf32, #tpu.memory_space<vmem>>, vector<8x8xf32>
    %35 = vector.broadcast %21 : vector<8x1xf32> to vector<8x8xf32>
    %36 = arith.mulf %35, %34 : vector<8x8xf32>
    %cst_23 = arith.constant dense<0.000000e+00> : vector<8x8xf32>
    %37 = tpu.matmul %24, %13, %cst_23 {dimension_numbers = #tpu.dot_dimension_numbers<[1], [0], [0], [1], [0, 0, 1, 1], [], []>} : vector<8x8xf32>, vector<8x8xf32>, vector<8x8xf32> -> vector<8x8xf32>
    %38 = arith.addf %36, %37 : vector<8x8xf32>
    %c0_24 = arith.constant 0 : index
    %c0_25 = arith.constant 0 : index
    %39 = vector.load %arg9[%c0_24, %c0_25] : memref<8x32xf32, #tpu.memory_space<vmem>>, vector<8x8xf32>
    tpu.vector_store %arg9[%c0_24, %c0_25], %38 {strides = array<i32>} : memref<8x32xf32, #tpu.memory_space<vmem>>, vector<8x8xf32>,
    %c0_26 = arith.constant 0 : index
    %c0_27 = arith.constant 0 : index
    %c0_28 = arith.constant 0 : index
    %40 = vector.load %arg7[%c0_26, %c0_27, %c0_28] : memref<4x8x1xf32, #tpu.memory_space<vmem>>, vector<1x8x1xf32>
    %41 = vector.shape_cast %40 : vector<1x8x1xf32> to vector<8x1xf32>
    %42 = vector.shape_cast %19 : vector<8x1xf32> to vector<1x8x1xf32>
    tpu.vector_store %arg7[%c0_26, %c0_27, %c0_28], %42 {strides = array<i32>} : memref<4x8x1xf32, #tpu.memory_space<vmem>>, vector<1x8x1xf32>,
    %43 = vector.extract_strided_slice %6 {offsets = [0, 8], sizes = [8, 8], strides = [1, 1]} : vector<8x32xf32> to vector<8x8xf32>
    %44 = vector.extract_strided_slice %8 {offsets = [0, 8], sizes = [8, 8], strides = [1, 1]} : vector<8x32xf32> to vector<8x8xf32>
    %45 = vector.extract_strided_slice %10 {offsets = [0, 8], sizes = [8, 8], strides = [1, 1]} : vector<8x32xf32> to vector<8x8xf32>
    %cst_29 = arith.constant dense<0.000000e+00> : vector<8x8xf32>
    %46 = tpu.matmul %43, %44, %cst_29 {dimension_numbers = #tpu.dot_dimension_numbers<[1], [1], [0], [0], [0, 0, 1, 0], [], []>} : vector<8x8xf32>, vector<8x8xf32>, vector<8x8xf32> -> vector<8x8xf32>
    %c1 = arith.constant 1 : index
    %c0_30 = arith.constant 0 : index
    %c0_31 = arith.constant 0 : index
    %47 = vector.load %arg7[%c1, %c0_30, %c0_31] : memref<4x8x1xf32, #tpu.memory_space<vmem>>, vector<1x8x1xf32>
    %48 = vector.shape_cast %47 : vector<1x8x1xf32> to vector<8x1xf32>
    %cst_32 = arith.constant dense<0xFF800000> : vector<8xf32>
    %49 = vector.multi_reduction <maximumf>, %46, %cst_32 [1] : vector<8x8xf32> to vector<8xf32>
    %50 = vector.shape_cast %49 : vector<8xf32> to vector<8x1xf32>
    %51 = arith.maximumf %48, %50 : vector<8x1xf32>
    %52 = arith.subf %48, %51 : vector<8x1xf32>
    %53 = math.exp %52 : vector<8x1xf32>
    %54 = vector.broadcast %51 : vector<8x1xf32> to vector<8x8xf32>
    %55 = arith.subf %46, %54 : vector<8x8xf32>
    %56 = math.exp %55 : vector<8x8xf32>
    %c1_33 = arith.constant 1 : index
    %c0_34 = arith.constant 0 : index
    %c0_35 = arith.constant 0 : index
    %57 = vector.load %arg8[%c1_33, %c0_34, %c0_35] : memref<4x8x1xf32, #tpu.memory_space<vmem>>, vector<1x8x1xf32>
    %58 = vector.shape_cast %57 : vector<1x8x1xf32> to vector<8x1xf32>
    %59 = arith.mulf %53, %58 : vector<8x1xf32>
    %cst_36 = arith.constant dense<0.000000e+00> : vector<8xf32>
    %60 = vector.multi_reduction <add>, %56, %cst_36 [1] : vector<8x8xf32> to vector<8xf32>
    %61 = vector.shape_cast %60 : vector<8xf32> to vector<8x1xf32>
    %62 = arith.addf %59, %61 : vector<8x1xf32>
    %c1_37 = arith.constant 1 : index
    %c0_38 = arith.constant 0 : index
    %c0_39 = arith.constant 0 : index
    %63 = vector.load %arg8[%c1_37, %c0_38, %c0_39] : memref<4x8x1xf32, #tpu.memory_space<vmem>>, vector<1x8x1xf32>
    %64 = vector.shape_cast %63 : vector<1x8x1xf32> to vector<8x1xf32>
    %65 = vector.shape_cast %62 : vector<8x1xf32> to vector<1x8x1xf32>
    tpu.vector_store %arg8[%c1_37, %c0_38, %c0_39], %65 {strides = array<i32>} : memref<4x8x1xf32, #tpu.memory_space<vmem>>, vector<1x8x1xf32>,
    %c0_40 = arith.constant 0 : index
    %c8 = arith.constant 8 : index
    %66 = vector.load %arg9[%c0_40, %c8] : memref<8x32xf32, #tpu.memory_space<vmem>>, vector<8x8xf32>
    %67 = vector.broadcast %53 : vector<8x1xf32> to vector<8x8xf32>
    %68 = arith.mulf %67, %66 : vector<8x8xf32>
    %cst_41 = arith.constant dense<0.000000e+00> : vector<8x8xf32>
    %69 = tpu.matmul %56, %45, %cst_41 {dimension_numbers = #tpu.dot_dimension_numbers<[1], [0], [0], [1], [0, 0, 1, 1], [], []>} : vector<8x8xf32>, vector<8x8xf32>, vector<8x8xf32> -> vector<8x8xf32>
    %70 = arith.addf %68, %69 : vector<8x8xf32>
    %c0_42 = arith.constant 0 : index
    %c8_43 = arith.constant 8 : index
    %71 = vector.load %arg9[%c0_42, %c8_43] : memref<8x32xf32, #tpu.memory_space<vmem>>, vector<8x8xf32>
    tpu.vector_store %arg9[%c0_42, %c8_43], %70 {strides = array<i32>} : memref<8x32xf32, #tpu.memory_space<vmem>>, vector<8x8xf32>,
    %c1_44 = arith.constant 1 : index
    %c0_45 = arith.constant 0 : index
    %c0_46 = arith.constant 0 : index
    %72 = vector.load %arg7[%c1_44, %c0_45, %c0_46] : memref<4x8x1xf32, #tpu.memory_space<vmem>>, vector<1x8x1xf32>
    %73 = vector.shape_cast %72 : vector<1x8x1xf32> to vector<8x1xf32>
    %74 = vector.shape_cast %51 : vector<8x1xf32> to vector<1x8x1xf32>
    tpu.vector_store %arg7[%c1_44, %c0_45, %c0_46], %74 {strides = array<i32>} : memref<4x8x1xf32, #tpu.memory_space<vmem>>, vector<1x8x1xf32>,
    %75 = vector.extract_strided_slice %6 {offsets = [0, 16], sizes = [8, 8], strides = [1, 1]} : vector<8x32xf32> to vector<8x8xf32>
    %76 = vector.extract_strided_slice %8 {offsets = [0, 16], sizes = [8, 8], strides = [1, 1]} : vector<8x32xf32> to vector<8x8xf32>
    %77 = vector.extract_strided_slice %10 {offsets = [0, 16], sizes = [8, 8], strides = [1, 1]} : vector<8x32xf32> to vector<8x8xf32>
    %cst_47 = arith.constant dense<0.000000e+00> : vector<8x8xf32>
    %78 = tpu.matmul %75, %76, %cst_47 {dimension_numbers = #tpu.dot_dimension_numbers<[1], [1], [0], [0], [0, 0, 1, 0], [], []>} : vector<8x8xf32>, vector<8x8xf32>, vector<8x8xf32> -> vector<8x8xf32>
    %c2 = arith.constant 2 : index
    %c0_48 = arith.constant 0 : index
    %c0_49 = arith.constant 0 : index
    %79 = vector.load %arg7[%c2, %c0_48, %c0_49] : memref<4x8x1xf32, #tpu.memory_space<vmem>>, vector<1x8x1xf32>
    %80 = vector.shape_cast %79 : vector<1x8x1xf32> to vector<8x1xf32>
    %cst_50 = arith.constant dense<0xFF800000> : vector<8xf32>
    %81 = vector.multi_reduction <maximumf>, %78, %cst_50 [1] : vector<8x8xf32> to vector<8xf32>
    %82 = vector.shape_cast %81 : vector<8xf32> to vector<8x1xf32>
    %83 = arith.maximumf %80, %82 : vector<8x1xf32>
    %84 = arith.subf %80, %83 : vector<8x1xf32>
    %85 = math.exp %84 : vector<8x1xf32>
    %86 = vector.broadcast %83 : vector<8x1xf32> to vector<8x8xf32>
    %87 = arith.subf %78, %86 : vector<8x8xf32>
    %88 = math.exp %87 : vector<8x8xf32>
    %c2_51 = arith.constant 2 : index
    %c0_52 = arith.constant 0 : index
    %c0_53 = arith.constant 0 : index
    %89 = vector.load %arg8[%c2_51, %c0_52, %c0_53] : memref<4x8x1xf32, #tpu.memory_space<vmem>>, vector<1x8x1xf32>
    %90 = vector.shape_cast %89 : vector<1x8x1xf32> to vector<8x1xf32>
    %91 = arith.mulf %85, %90 : vector<8x1xf32>
    %cst_54 = arith.constant dense<0.000000e+00> : vector<8xf32>
    %92 = vector.multi_reduction <add>, %88, %cst_54 [1] : vector<8x8xf32> to vector<8xf32>
    %93 = vector.shape_cast %92 : vector<8xf32> to vector<8x1xf32>
    %94 = arith.addf %91, %93 : vector<8x1xf32>
    %c2_55 = arith.constant 2 : index
    %c0_56 = arith.constant 0 : index
    %c0_57 = arith.constant 0 : index
    %95 = vector.load %arg8[%c2_55, %c0_56, %c0_57] : memref<4x8x1xf32, #tpu.memory_space<vmem>>, vector<1x8x1xf32>
    %96 = vector.shape_cast %95 : vector<1x8x1xf32> to vector<8x1xf32>
    %97 = vector.shape_cast %94 : vector<8x1xf32> to vector<1x8x1xf32>
    tpu.vector_store %arg8[%c2_55, %c0_56, %c0_57], %97 {strides = array<i32>} : memref<4x8x1xf32, #tpu.memory_space<vmem>>, vector<1x8x1xf32>,
    %c0_58 = arith.constant 0 : index
    %c16 = arith.constant 16 : index
    %98 = vector.load %arg9[%c0_58, %c16] : memref<8x32xf32, #tpu.memory_space<vmem>>, vector<8x8xf32>
    %99 = vector.broadcast %85 : vector<8x1xf32> to vector<8x8xf32>
    %100 = arith.mulf %99, %98 : vector<8x8xf32>
    %cst_59 = arith.constant dense<0.000000e+00> : vector<8x8xf32>
    %101 = tpu.matmul %88, %77, %cst_59 {dimension_numbers = #tpu.dot_dimension_numbers<[1], [0], [0], [1], [0, 0, 1, 1], [], []>} : vector<8x8xf32>, vector<8x8xf32>, vector<8x8xf32> -> vector<8x8xf32>
    %102 = arith.addf %100, %101 : vector<8x8xf32>
    %c0_60 = arith.constant 0 : index
    %c16_61 = arith.constant 16 : index
    %103 = vector.load %arg9[%c0_60, %c16_61] : memref<8x32xf32, #tpu.memory_space<vmem>>, vector<8x8xf32>
    tpu.vector_store %arg9[%c0_60, %c16_61], %102 {strides = array<i32>} : memref<8x32xf32, #tpu.memory_space<vmem>>, vector<8x8xf32>,
    %c2_62 = arith.constant 2 : index
    %c0_63 = arith.constant 0 : index
    %c0_64 = arith.constant 0 : index
    %104 = vector.load %arg7[%c2_62, %c0_63, %c0_64] : memref<4x8x1xf32, #tpu.memory_space<vmem>>, vector<1x8x1xf32>
    %105 = vector.shape_cast %104 : vector<1x8x1xf32> to vector<8x1xf32>
    %106 = vector.shape_cast %83 : vector<8x1xf32> to vector<1x8x1xf32>
    tpu.vector_store %arg7[%c2_62, %c0_63, %c0_64], %106 {strides = array<i32>} : memref<4x8x1xf32, #tpu.memory_space<vmem>>, vector<1x8x1xf32>,
    %107 = vector.extract_strided_slice %6 {offsets = [0, 24], sizes = [8, 8], strides = [1, 1]} : vector<8x32xf32> to vector<8x8xf32>
    %108 = vector.extract_strided_slice %8 {offsets = [0, 24], sizes = [8, 8], strides = [1, 1]} : vector<8x32xf32> to vector<8x8xf32>
    %109 = vector.extract_strided_slice %10 {offsets = [0, 24], sizes = [8, 8], strides = [1, 1]} : vector<8x32xf32> to vector<8x8xf32>
    %cst_65 = arith.constant dense<0.000000e+00> : vector<8x8xf32>
    %110 = tpu.matmul %107, %108, %cst_65 {dimension_numbers = #tpu.dot_dimension_numbers<[1], [1], [0], [0], [0, 0, 1, 0], [], []>} : vector<8x8xf32>, vector<8x8xf32>, vector<8x8xf32> -> vector<8x8xf32>
    %c3 = arith.constant 3 : index
    %c0_66 = arith.constant 0 : index
    %c0_67 = arith.constant 0 : index
    %111 = vector.load %arg7[%c3, %c0_66, %c0_67] : memref<4x8x1xf32, #tpu.memory_space<vmem>>, vector<1x8x1xf32>
    %112 = vector.shape_cast %111 : vector<1x8x1xf32> to vector<8x1xf32>
    %cst_68 = arith.constant dense<0xFF800000> : vector<8xf32>
    %113 = vector.multi_reduction <maximumf>, %110, %cst_68 [1] : vector<8x8xf32> to vector<8xf32>
    %114 = vector.shape_cast %113 : vector<8xf32> to vector<8x1xf32>
    %115 = arith.maximumf %112, %114 : vector<8x1xf32>
    %116 = arith.subf %112, %115 : vector<8x1xf32>
    %117 = math.exp %116 : vector<8x1xf32>
    %118 = vector.broadcast %115 : vector<8x1xf32> to vector<8x8xf32>
    %119 = arith.subf %110, %118 : vector<8x8xf32>
    %120 = math.exp %119 : vector<8x8xf32>
    %c3_69 = arith.constant 3 : index
    %c0_70 = arith.constant 0 : index
    %c0_71 = arith.constant 0 : index
    %121 = vector.load %arg8[%c3_69, %c0_70, %c0_71] : memref<4x8x1xf32, #tpu.memory_space<vmem>>, vector<1x8x1xf32>
    %122 = vector.shape_cast %121 : vector<1x8x1xf32> to vector<8x1xf32>
    %123 = arith.mulf %117, %122 : vector<8x1xf32>
    %cst_72 = arith.constant dense<0.000000e+00> : vector<8xf32>
    %124 = vector.multi_reduction <add>, %120, %cst_72 [1] : vector<8x8xf32> to vector<8xf32>
    %125 = vector.shape_cast %124 : vector<8xf32> to vector<8x1xf32>
    %126 = arith.addf %123, %125 : vector<8x1xf32>
    %c3_73 = arith.constant 3 : index
    %c0_74 = arith.constant 0 : index
    %c0_75 = arith.constant 0 : index
    %127 = vector.load %arg8[%c3_73, %c0_74, %c0_75] : memref<4x8x1xf32, #tpu.memory_space<vmem>>, vector<1x8x1xf32>
    %128 = vector.shape_cast %127 : vector<1x8x1xf32> to vector<8x1xf32>
    %129 = vector.shape_cast %126 : vector<8x1xf32> to vector<1x8x1xf32>
    tpu.vector_store %arg8[%c3_73, %c0_74, %c0_75], %129 {strides = array<i32>} : memref<4x8x1xf32, #tpu.memory_space<vmem>>, vector<1x8x1xf32>,
    %c0_76 = arith.constant 0 : index
    %c24 = arith.constant 24 : index
    %130 = vector.load %arg9[%c0_76, %c24] : memref<8x32xf32, #tpu.memory_space<vmem>>, vector<8x8xf32>
    %131 = vector.broadcast %117 : vector<8x1xf32> to vector<8x8xf32>
    %132 = arith.mulf %131, %130 : vector<8x8xf32>
    %cst_77 = arith.constant dense<0.000000e+00> : vector<8x8xf32>
    %133 = tpu.matmul %120, %109, %cst_77 {dimension_numbers = #tpu.dot_dimension_numbers<[1], [0], [0], [1], [0, 0, 1, 1], [], []>} : vector<8x8xf32>, vector<8x8xf32>, vector<8x8xf32> -> vector<8x8xf32>
    %134 = arith.addf %132, %133 : vector<8x8xf32>
    %c0_78 = arith.constant 0 : index
    %c24_79 = arith.constant 24 : index
    %135 = vector.load %arg9[%c0_78, %c24_79] : memref<8x32xf32, #tpu.memory_space<vmem>>, vector<8x8xf32>
    tpu.vector_store %arg9[%c0_78, %c24_79], %134 {strides = array<i32>} : memref<8x32xf32, #tpu.memory_space<vmem>>, vector<8x8xf32>,
    %c3_80 = arith.constant 3 : index
    %c0_81 = arith.constant 0 : index
    %c0_82 = arith.constant 0 : index
    %136 = vector.load %arg7[%c3_80, %c0_81, %c0_82] : memref<4x8x1xf32, #tpu.memory_space<vmem>>, vector<1x8x1xf32>
    %137 = vector.shape_cast %136 : vector<1x8x1xf32> to vector<8x1xf32>
    %138 = vector.shape_cast %115 : vector<8x1xf32> to vector<1x8x1xf32>
    tpu.vector_store %arg7[%c3_80, %c0_81, %c0_82], %138 {strides = array<i32>} : memref<4x8x1xf32, #tpu.memory_space<vmem>>, vector<1x8x1xf32>,
    %c0_i32_83 = arith.constant 0 : i32
    %139 = arith.cmpi eq, %arg2, %c0_i32_83 : i32
    %140 = arith.extui %139 : i1 to i32
    %c0_i32_84 = arith.constant 0 : i32
    %141 = arith.cmpi ne, %140, %c0_i32_84 : i32
    scf.if %141 {
      %c0_85 = arith.constant 0 : index
      %c0_86 = arith.constant 0 : index
      %c0_87 = arith.constant 0 : index
      %142 = vector.load %arg8[%c0_85, %c0_86, %c0_87] : memref<4x8x1xf32, #tpu.memory_space<vmem>>, vector<1x8x1xf32>
      %143 = vector.shape_cast %142 : vector<1x8x1xf32> to vector<8x1xf32>
      %144 = tpu.reciprocal %143 : vector<8x1xf32> -> vector<8x1xf32>
      %c0_88 = arith.constant 0 : index
      %c0_89 = arith.constant 0 : index
      %145 = vector.load %arg9[%c0_88, %c0_89] : memref<8x32xf32, #tpu.memory_space<vmem>>, vector<8x8xf32>
      %146 = vector.broadcast %144 : vector<8x1xf32> to vector<8x8xf32>
      %147 = arith.mulf %145, %146 : vector<8x8xf32>
      %c1_90 = arith.constant 1 : index
      %c0_91 = arith.constant 0 : index
      %c0_92 = arith.constant 0 : index
      %148 = vector.load %arg8[%c1_90, %c0_91, %c0_92] : memref<4x8x1xf32, #tpu.memory_space<vmem>>, vector<1x8x1xf32>
      %149 = vector.shape_cast %148 : vector<1x8x1xf32> to vector<8x1xf32>
      %150 = tpu.reciprocal %149 : vector<8x1xf32> -> vector<8x1xf32>
      %c0_93 = arith.constant 0 : index
      %c8_94 = arith.constant 8 : index
      %151 = vector.load %arg9[%c0_93, %c8_94] : memref<8x32xf32, #tpu.memory_space<vmem>>, vector<8x8xf32>
      %152 = vector.broadcast %150 : vector<8x1xf32> to vector<8x8xf32>
      %153 = arith.mulf %151, %152 : vector<8x8xf32>
      %c2_95 = arith.constant 2 : index
      %c0_96 = arith.constant 0 : index
      %c0_97 = arith.constant 0 : index
      %154 = vector.load %arg8[%c2_95, %c0_96, %c0_97] : memref<4x8x1xf32, #tpu.memory_space<vmem>>, vector<1x8x1xf32>
      %155 = vector.shape_cast %154 : vector<1x8x1xf32> to vector<8x1xf32>
      %156 = tpu.reciprocal %155 : vector<8x1xf32> -> vector<8x1xf32>
      %c0_98 = arith.constant 0 : index
      %c16_99 = arith.constant 16 : index
      %157 = vector.load %arg9[%c0_98, %c16_99] : memref<8x32xf32, #tpu.memory_space<vmem>>, vector<8x8xf32>
      %158 = vector.broadcast %156 : vector<8x1xf32> to vector<8x8xf32>
      %159 = arith.mulf %157, %158 : vector<8x8xf32>
      %c3_100 = arith.constant 3 : index
      %c0_101 = arith.constant 0 : index
      %c0_102 = arith.constant 0 : index
      %160 = vector.load %arg8[%c3_100, %c0_101, %c0_102] : memref<4x8x1xf32, #tpu.memory_space<vmem>>, vector<1x8x1xf32>
      %161 = vector.shape_cast %160 : vector<1x8x1xf32> to vector<8x1xf32>
      %162 = tpu.reciprocal %161 : vector<8x1xf32> -> vector<8x1xf32>
      %c0_103 = arith.constant 0 : index
      %c24_104 = arith.constant 24 : index
      %163 = vector.load %arg9[%c0_103, %c24_104] : memref<8x32xf32, #tpu.memory_space<vmem>>, vector<8x8xf32>
      %164 = vector.broadcast %162 : vector<8x1xf32> to vector<8x8xf32>
      %165 = arith.mulf %163, %164 : vector<8x8xf32>
      %166 = tpu.concatenate %147, %153, %159, %165 in 1 : vector<8x8xf32>, vector<8x8xf32>, vector<8x8xf32>, vector<8x8xf32> -> vector<8x32xf32>
      %c0_105 = arith.constant 0 : index
      %c0_106 = arith.constant 0 : index
      %c0_107 = arith.constant 0 : index
      %167 = vector.load %arg6[%c0_105, %c0_106, %c0_107] : memref<1x8x32xf32, #tpu.memory_space<vmem>>, vector<1x8x32xf32>
      %168 = vector.shape_cast %167 : vector<1x8x32xf32> to vector<8x32xf32>
      %169 = vector.shape_cast %166 : vector<8x32xf32> to vector<1x8x32xf32>
      tpu.vector_store %arg6[%c0_105, %c0_106, %c0_107], %169 {strides = array<i32>} : memref<1x8x32xf32, #tpu.memory_space<vmem>>, vector<1x8x32xf32>,
    } else {
    }
    return
  }
  func.func @transform_0(%arg0: i32, %arg1: i32, %arg2: i32) -> (i32, i32, i32) {
    %c0_i32 = arith.constant 0 : i32
    %c0_i32_0 = arith.constant 0 : i32
    return %arg0, %arg1, %c0_i32 : i32, i32, i32
  }
  func.func @transform_1(%arg0: i32, %arg1: i32, %arg2: i32) -> (i32, i32, i32) {
    %c0_i32 = arith.constant 0 : i32
    %c0_i32_0 = arith.constant 0 : i32
    return %arg0, %arg2, %c0_i32 : i32, i32, i32
  }
  func.func @transform_2(%arg0: i32, %arg1: i32, %arg2: i32) -> (i32, i32, i32) {
    %c0_i32 = arith.constant 0 : i32
    %c0_i32_0 = arith.constant 0 : i32
    return %arg0, %arg2, %c0_i32 : i32, i32, i32
  }
  func.func @transform_3(%arg0: i32, %arg1: i32, %arg2: i32) -> (i32, i32, i32) {
    %c0_i32 = arith.constant 0 : i32
    %c0_i32_0 = arith.constant 0 : i32
    return %arg0, %arg1, %c0_i32 : i32, i32, i32
  }
}

</mosaic_0001>

<llo_original>
// kernel: tpu_custom_call.1
$region0: #{tpu_custom_call.1}
  #allocation0 [shape = 'u32[]', space=smem, size = 0x4, offset = 0x4, fixed_abs, tag = 'smem constant byte address 0x4 - core index']
  #allocation1 [shape = 'u32[144,128]{1,0:T(1,128)}', space=vmem, size = 0x12000, scoped, tag = 'internal scratch']
  #allocation2 [shape = 'f32[4,8,1]{2,1,0:T(8,128)}', space=vmem, size = 0x4000, scoped, tag = 'scratch operand']
  #allocation3 [shape = 'f32[4,8,1]{2,1,0:T(8,128)}', space=vmem, size = 0x4000, scoped, tag = 'scratch operand']
  #allocation4 [shape = 'f32[8,32]{1,0:T(8,128)}', space=vmem, size = 0x1000, scoped, tag = 'scratch operand']
  %s0 = inlined_call_operand.hbm [shape: f32[2,8,32], index: 0, kind: input, shape index: {}]
  %s1 = inlined_call_operand.hbm [shape: f32[2,8,32], index: 1, kind: input, shape index: {}]
  %s2 = inlined_call_operand.hbm [shape: f32[2,8,32], index: 2, kind: input, shape index: {}]
  %s3 = inlined_call_operand.hbm [shape: f32[2,8,32], index: 3, kind: output, shape index: {}]
  %s4 = sld [smem:[#allocation0]]
  $region65: #{tpu_custom_call.1} parent=0
    _
  %s6 = ssub.s32 1, %s4
  %s7 = scalar_select 0, %s6, %s4
  $region1: #{tpu_custom_call.1} parent=0
    #allocation5 [shape = 'u8[8192]{0}', space=vmem, size = 0x2000, scoped, tag = 'input window, operand 0']
    #allocation6 [shape = 's32[2]{0}', space=sflag, size = 0x8, scoped, tag = 'scoped memory for tpu_custom_call.1']
    #allocation7 [shape = 's32[2]{0}', space=sflag, size = 0x8, scoped, tag = 'scoped memory for tpu_custom_call.1']
    #allocation8 [shape = 'u8[8192]{0}', space=vmem, size = 0x2000, scoped, tag = 'input window, operand 1']
    #allocation9 [shape = 's32[2]{0}', space=sflag, size = 0x8, scoped, tag = 'scoped memory for tpu_custom_call.1']
    #allocation10 [shape = 'u8[8192]{0}', space=vmem, size = 0x2000, scoped, tag = 'input window, operand 2']
    #allocation11 [shape = 'u8[8192]{0}', space=vmem, size = 0x2000, scoped, tag = 'output window, operand 0']
    %8 = vsyncpa [#allocation6], 0
    %s9 = scalar_lea.sflag [#allocation6], 1
    %10 = vsyncpa %s9, 0
    %11 = vsyncpa [#allocation9], 0
    %s12 = scalar_lea.sflag [#allocation9], 1
    %13 = vsyncpa %s12, 0
    %14 = vsyncpa [#allocation7], 0
    %s15 = scalar_lea.sflag [#allocation7], 1
    %16 = vsyncpa %s15, 0
    loop: start=0, step=1, limit=4
    $region2: #{tpu_custom_call.1} parent=1 // loop_pre_header
      _
    $region3: #{tpu_custom_call.1} parent=1 // loop_header
      %s18 = sphi 0, %s22
      %p19 = scmp.ge.s32.totalorder %s18, 4
      %s25 = sphi 0, %s44
      %s26 = sphi 0, %s40
      %s27 = sphi 0, %s36
      %s28 = sphi 0, %s25
      %s29 = sphi 0, %s26
      %s30 = sphi 0, %s27
      %s31 = sphi 0, %s28
      %s32 = sphi 0, %s29
      %s33 = sphi 0, %s30
      %s49 = sphi 0, %s51
      %s52 = sphi 0, %s49
      %s53 = sphi 0, %s52
      %s69 = sphi 0, %s53
      %s77 = sphi 0, %s79
      %s80 = sphi 0, %s77
      %s81 = sphi 0, %s80
      %s97 = sphi 0, %s81
      %s105 = sphi 0, %s107
      %s108 = sphi 0, %s105
      %s109 = sphi 0, %s108
      %s125 = sphi 0, %s109
      %s133 = sphi 0, %s135
      %s136 = sphi 0, %s133
      %s137 = sphi 0, %s136
      %s153 = sphi 0, %s137
    $region4: #{tpu_custom_call.1} parent=1 // loop_header_branch
      %21 = sbr.rel (%p19) target = $region8
    $region5: #{tpu_custom_call.1} parent=1 // loop_body
      %s23 = ssub.s32 %s18, 1
      %s24 = ssub.s32 %s18, 2
      %s34 = sadd.s32 1, %s27
      %p35 = scmp.ge.s32.totalorder %s34, 1
      %s36 = scalar_select %p35, 0, %s34
      %s37 = sadd.s32 1, %s26
      %s38 = scalar_select %p35, %s37, %s26
      %p39 = scmp.ge.s32.totalorder %s38, 1
      %s40 = scalar_select %p39, 0, %s38
      %s41 = sadd.s32 1, %s25
      %s42 = scalar_select %p39, %s41, %s25
      %p43 = scmp.ge.s32.totalorder %s42, 2
      %s44 = scalar_select %p43, 0, %s42
      %s45 = ssub.s32 %s25, %s44
      %s46 = ssub.s32 %s26, %s40
      %s47 = sor.u32 %s45, %s46
      %p48 = scmp.eq.s32.totalorder %s47, 0
      %s50 = sadd.s32 %s49, 1
      %s51 = scalar_select %p48, %s49, %s50
      %p54 = pneg %p48
      %p55 = scmp.eq.s32.totalorder %s18, 1
      %p56 = por %p54, %p55
      %p57 = scmp.ne.s32.totalorder %s49, %s52
      %p58 = scmp.eq.s32.totalorder %s18, 0
      %p59 = por %p57, %p58
      %p60 = scmp.ne.s32.totalorder %s49, %s52
      %p61 = scmp.eq.s32.totalorder %s23, 1
      %p62 = por %p60, %p61
      %p63 = scmp.ne.s32.totalorder %s52, %s53
      %p64 = scmp.eq.s32.totalorder %s23, 0
      %p65 = por %p63, %p64
      %p66 = scmp.ne.s32.totalorder %s52, %s53
      %p67 = scmp.eq.s32.totalorder %s24, 1
      %p68 = por %p66, %p67
      %p70 = scmp.ne.s32.totalorder %s53, %s69
      %p71 = scmp.eq.s32.totalorder %s24, 0
      %p72 = por %p70, %p71
      %s73 = ssub.s32 %s25, %s44
      %s74 = ssub.s32 %s27, %s36
      %s75 = sor.u32 %s73, %s74
      %p76 = scmp.eq.s32.totalorder %s75, 0
      %s78 = sadd.s32 %s77, 1
      %s79 = scalar_select %p76, %s77, %s78
      %p82 = pneg %p76
      %p83 = scmp.eq.s32.totalorder %s18, 1
      %p84 = por %p82, %p83
      %p85 = scmp.ne.s32.totalorder %s77, %s80
      %p86 = scmp.eq.s32.totalorder %s18, 0
      %p87 = por %p85, %p86
      %p88 = scmp.ne.s32.totalorder %s77, %s80
      %p89 = scmp.eq.s32.totalorder %s23, 1
      %p90 = por %p88, %p89
      %p91 = scmp.ne.s32.totalorder %s80, %s81
      %p92 = scmp.eq.s32.totalorder %s23, 0
      %p93 = por %p91, %p92
      %p94 = scmp.ne.s32.totalorder %s80, %s81
      %p95 = scmp.eq.s32.totalorder %s24, 1
      %p96 = por %p94, %p95
      %p98 = scmp.ne.s32.totalorder %s81, %s97
      %p99 = scmp.eq.s32.totalorder %s24, 0
      %p100 = por %p98, %p99
      %s101 = ssub.s32 %s25, %s44
      %s102 = ssub.s32 %s27, %s36
      %s103 = sor.u32 %s101, %s102
      %p104 = scmp.eq.s32.totalorder %s103, 0
      %s106 = sadd.s32 %s105, 1
      %s107 = scalar_select %p104, %s105, %s106
      %p110 = pneg %p104
      %p111 = scmp.eq.s32.totalorder %s18, 1
      %p112 = por %p110, %p111
      %p113 = scmp.ne.s32.totalorder %s105, %s108
      %p114 = scmp.eq.s32.totalorder %s18, 0
      %p115 = por %p113, %p114
      %p116 = scmp.ne.s32.totalorder %s105, %s108
      %p117 = scmp.eq.s32.totalorder %s23, 1
      %p118 = por %p116, %p117
      %p119 = scmp.ne.s32.totalorder %s108, %s109
      %p120 = scmp.eq.s32.totalorder %s23, 0
      %p121 = por %p119, %p120
      %p122 = scmp.ne.s32.totalorder %s108, %s109
      %p123 = scmp.eq.s32.totalorder %s24, 1
      %p124 = por %p122, %p123
      %p126 = scmp.ne.s32.totalorder %s109, %s125
      %p127 = scmp.eq.s32.totalorder %s24, 0
      %p128 = por %p126, %p127
      %s129 = ssub.s32 %s25, %s44
      %s130 = ssub.s32 %s26, %s40
      %s131 = sor.u32 %s129, %s130
      %p132 = scmp.eq.s32.totalorder %s131, 0
      %s134 = sadd.s32 %s133, 1
      %s135 = scalar_select %p132, %s133, %s134
      %p138 = pneg %p132
      %p139 = scmp.eq.s32.totalorder %s18, 1
      %p140 = por %p138, %p139
      %p141 = scmp.ne.s32.totalorder %s133, %s136
      %p142 = scmp.eq.s32.totalorder %s18, 0
      %p143 = por %p141, %p142
      %p144 = scmp.ne.s32.totalorder %s133, %s136
      %p145 = scmp.eq.s32.totalorder %s23, 1
      %p146 = por %p144, %p145
      %p147 = scmp.ne.s32.totalorder %s136, %s137
      %p148 = scmp.eq.s32.totalorder %s23, 0
      %p149 = por %p147, %p148
      %p150 = scmp.ne.s32.totalorder %s136, %s137
      %p151 = scmp.eq.s32.totalorder %s24, 1
      %p152 = por %p150, %p151
      %p154 = scmp.ne.s32.totalorder %s137, %s153
      %p155 = scmp.eq.s32.totalorder %s24, 0
      %p156 = por %p154, %p155
      %p157 = scmp.le.s32.totalorder 1, %s18
      %p158 = scmp.lt.s32.totalorder %s18, 3
      %p159 = pnand %p157, %p158
      %p160 = pneg %p159
      // Predicated region
      $region9: #{tpu_custom_call.1} parent=5 // pred_check
        _
      $region10: #{tpu_custom_call.1} parent=5 // pred_check_branch
        %162 = sbr.rel (%p159) target = $region12
      $region11: #{tpu_custom_call.1} parent=5 // pred_region
        %s163 = ssub.s32 %s18, 1
      $region12: #{tpu_custom_call.1} parent=5 // pred_fallthru
        _
      %p164 = scmp.lt.s32.totalorder %s18, 2
      // Predicated region
      $region13: #{tpu_custom_call.1} parent=5 // pred_check
        %p165 = pneg %p164
      $region14: #{tpu_custom_call.1} parent=5 // pred_check_branch
        %167 = sbr.rel (%p165) target = $region16
      $region15: #{tpu_custom_call.1} parent=5 // pred_region
        // Predicated region
        $region17: #{tpu_custom_call.1} parent=15 // pred_check
          %p168 = pneg %p59
        $region18: #{tpu_custom_call.1} parent=15 // pred_check_branch
          %170 = sbr.rel (%p168) target = $region20
        $region19: #{tpu_custom_call.1} parent=15 // pred_region
          %s171 = sand.u32 %s49, 1
          %s172 = scalar_lea.sflag [#allocation6], %s171
          %s173 = sand.u32 %s49, 1
          %s174 = smul.addr %s173, 8
          %s175 = scalar_lea.vmem [#allocation5], %s174
          %s177 = ssub.s32 128, 128
          %178 = vsyncadd %s172, %s177
          %s179 = sadd.s32 %s26, %s25
          %s180 = smul.addr %s179, 128
          %s181 = scalar_lea.hbm %s0, %s180
          %s183 = sshll.u32 %s175, 4
          %s184 = int_to_ptr.vmem [resolvable:$true] %s183
          %186 = dma.hbm_to_vmem [thread:$0]  %s181, 128, %s184, %s172
        $region20: #{tpu_custom_call.1} parent=15 // pred_fallthru
          _
        // Predicated region
        $region21: #{tpu_custom_call.1} parent=15 // pred_check
          %p187 = pneg %p87
        $region22: #{tpu_custom_call.1} parent=15 // pred_check_branch
          %189 = sbr.rel (%p187) target = $region24
        $region23: #{tpu_custom_call.1} parent=15 // pred_region
          %s190 = sand.u32 %s18, 1
          %s191 = scalar_lea.sflag [#allocation9], %s190
          %s192 = sand.u32 %s77, 1
          %s193 = smul.addr %s192, 8
          %s194 = scalar_lea.vmem [#allocation8], %s193
          %s196 = ssub.s32 128, 128
          %197 = vsyncadd %s191, %s196
          %s198 = sadd.s32 %s27, %s25
          %s199 = smul.addr %s198, 128
          %s200 = scalar_lea.hbm %s1, %s199
          %s202 = sshll.u32 %s194, 4
          %s203 = int_to_ptr.vmem [resolvable:$true] %s202
          %205 = dma.hbm_to_vmem [thread:$0]  %s200, 128, %s203, %s191
        $region24: #{tpu_custom_call.1} parent=15 // pred_fallthru
          _
        // Predicated region
        $region25: #{tpu_custom_call.1} parent=15 // pred_check
          %p206 = pneg %p115
        $region26: #{tpu_custom_call.1} parent=15 // pred_check_branch
          %208 = sbr.rel (%p206) target = $region28
        $region27: #{tpu_custom_call.1} parent=15 // pred_region
          %s209 = sand.u32 %s18, 1
          %s210 = scalar_lea.sflag [#allocation9], %s209
          %s211 = sand.u32 %s105, 1
          %s212 = smul.addr %s211, 8
          %s213 = scalar_lea.vmem [#allocation10], %s212
          %s215 = ssub.s32 128, 128
          %216 = vsyncadd %s210, %s215
          %s217 = sadd.s32 %s27, %s25
          %s218 = smul.addr %s217, 128
          %s219 = scalar_lea.hbm %s2, %s218
          %s221 = sshll.u32 %s213, 4
          %s222 = int_to_ptr.vmem [resolvable:$true] %s221
          %224 = dma.hbm_to_vmem [thread:$0]  %s219, 128, %s222, %s210
        $region28: #{tpu_custom_call.1} parent=15 // pred_fallthru
          _
      $region16: #{tpu_custom_call.1} parent=5 // pred_fallthru
        _
      %p225 = scmp.le.s32.totalorder 1, %s18
      %p226 = scmp.lt.s32.totalorder %s18, 3
      %p227 = pnand %p225, %p226
      %p228 = pneg %p227
      // Predicated region
      $region29: #{tpu_custom_call.1} parent=5 // pred_check
        _
      $region30: #{tpu_custom_call.1} parent=5 // pred_check_branch
        %230 = sbr.rel (%p227) target = $region32
      $region31: #{tpu_custom_call.1} parent=5 // pred_region
        %s231 = ssub.s32 %s18, 1
        %s232 = sand.u32 %s52, 1
        %s233 = scalar_lea.sflag [#allocation6], %s232
        %s234 = sand.u32 %s52, 1
        %s235 = smul.addr %s234, 8
        %s236 = scalar_lea.vmem [#allocation5], %s235
        // Predicated region
        $region33: #{tpu_custom_call.1} parent=31 // pred_check
          %p237 = pneg %p65
        $region34: #{tpu_custom_call.1} parent=31 // pred_check_branch
          %239 = sbr.rel (%p237) target = $region36
        $region35: #{tpu_custom_call.1} parent=31 // pred_region
          %240 = dma.done %s233, 128
        $region36: #{tpu_custom_call.1} parent=31 // pred_fallthru
          _
        %s241 = sand.u32 %s23, 1
        %s242 = scalar_lea.sflag [#allocation9], %s241
        %s243 = sand.u32 %s80, 1
        %s244 = smul.addr %s243, 8
        %s245 = scalar_lea.vmem [#allocation8], %s244
        // Predicated region
        $region37: #{tpu_custom_call.1} parent=31 // pred_check
          %p246 = pneg %p93
        $region38: #{tpu_custom_call.1} parent=31 // pred_check_branch
          %248 = sbr.rel (%p246) target = $region40
        $region39: #{tpu_custom_call.1} parent=31 // pred_region
          %249 = dma.done %s242, 128
        $region40: #{tpu_custom_call.1} parent=31 // pred_fallthru
          _
        %s250 = sand.u32 %s23, 1
        %s251 = scalar_lea.sflag [#allocation9], %s250
        %s252 = sand.u32 %s108, 1
        %s253 = smul.addr %s252, 8
        %s254 = scalar_lea.vmem [#allocation10], %s253
        // Predicated region
        $region41: #{tpu_custom_call.1} parent=31 // pred_check
          %p255 = pneg %p121
        $region42: #{tpu_custom_call.1} parent=31 // pred_check_branch
          %257 = sbr.rel (%p255) target = $region44
        $region43: #{tpu_custom_call.1} parent=31 // pred_region
          %258 = dma.done %s251, 128
        $region44: #{tpu_custom_call.1} parent=31 // pred_fallthru
          _
        %s259 = sand.u32 %s52, 1
        %s260 = scalar_lea.sflag [#allocation6], %s259
        %s261 = sand.u32 %s52, 1
        %s262 = smul.addr %s261, 8
        %s263 = scalar_lea.vmem [#allocation5], %s262
        %p264 = pneg %p65
        %p265 = pneg %p62
        %s266 = sand.u32 %s23, 1
        %s267 = scalar_lea.sflag [#allocation9], %s266
        %s268 = sand.u32 %s80, 1
        %s269 = smul.addr %s268, 8
        %s270 = scalar_lea.vmem [#allocation8], %s269
        %p271 = pneg %p93
        %p272 = pneg %p90
        %s273 = sand.u32 %s23, 1
        %s274 = scalar_lea.sflag [#allocation9], %s273
        %s275 = sand.u32 %s108, 1
        %s276 = smul.addr %s275, 8
        %s277 = scalar_lea.vmem [#allocation10], %s276
        %p278 = pneg %p121
        %p279 = pneg %p118
        %p280 = pneg %p149
        %p281 = pneg %p146
        %s282 = sand.u32 %s136, 1
        %s283 = scalar_lea.sflag [#allocation7], %s282
        %s284 = sand.u32 %s136, 1
        %s285 = smul.addr %s284, 8
        %s286 = scalar_lea.vmem [#allocation11], %s285
        %p287 = scmp.eq.s32.totalorder %s30, 0
        // Predicated region
        $region45: #{tpu_custom_call.1} parent=31 // pred_check
          %p288 = pneg %p287
        $region46: #{tpu_custom_call.1} parent=31 // pred_check_branch
          %290 = sbr.rel (%p288) target = $region48
        $region47: #{tpu_custom_call.1} parent=31 // pred_region
          %vm291 = vcmask 7168
          %292 = vst.msk [vmem:[#allocation2] sm:$0xff] %vm291, -inf
          %293 = vst.msk [vmem:[#allocation2 + $0x8] sm:$0xff] %vm291, -inf
          %294 = vst.msk [vmem:[#allocation2 + $0x10] sm:$0xff] %vm291, -inf
          %295 = vst.msk [vmem:[#allocation2 + $0x18] sm:$0xff] %vm291, -inf
          %296 = vst.msk [vmem:[#allocation3] sm:$0xff] %vm291, 0.0
          %297 = vst.msk [vmem:[#allocation3 + $0x8] sm:$0xff] %vm291, 0.0
          %298 = vst.msk [vmem:[#allocation3 + $0x10] sm:$0xff] %vm291, 0.0
          %299 = vst.msk [vmem:[#allocation3 + $0x18] sm:$0xff] %vm291, 0.0
          %vm300 = vcmask 261120
          %301 = vst.msk [vmem:[#allocation4] sm:$0xff] %vm300, 0.0
        $region48: #{tpu_custom_call.1} parent=31 // pred_fallthru
          _
        %v302 = vld [vmem:[%s236] sm:$0xff]
        %v303 = vmul.f32 %v302, 0.35355338
        %v304 = vld [vmem:[%s245] sm:$0xff]
        %v305 = vld [vmem:[%s254] sm:$0xff]
        %vm306 = vcmask 64512
        %v308 = vsel %vm306, %v303, 0
        %v311 = vsel %vm306, %v304, 0
        %313 = vmatprep.subr.mxu0 0.0
        %314 = vmatpush1.xpose.msra.mxu0 %v311
        %315 = vmatprep.subr.mxu0 0.0
        %316 = vmatpush1.xpose.msra.mxu0 0.0
        %317 = vmatprep.subr.mxu0 0.0
        %318 = vmatpush1.xpose.msra.mxu0 0.0
        %319 = vmatprep.subr.mxu0 0.0
        %320 = vmatpush1.xpose.msra.mxu0 0.0
        %321 = vmatprep.subr.mxu0 0.0
        %322 = vmatpush1.xpose.msra.mxu0 0.0
        %323 = vmatprep.subr.mxu0 0.0
        %324 = vmatpush1.xpose.msra.mxu0 0.0
        %325 = vmatprep.subr.mxu0 0.0
        %326 = vmatpush1.xpose.msra.mxu0 0.0
        %327 = vmatprep.subr.mxu0 0.0
        %328 = vmatpush1.xpose.msra.mxu0 0.0
        %329 = vmatprep.subr.mxu0 0.0
        %330 = vmatpush1.xpose.msra.mxu0 0.0
        %331 = vmatprep.subr.mxu0 0.0
        %332 = vmatpush1.xpose.msra.mxu0 0.0
        %333 = vmatprep.subr.mxu0 0.0
        %334 = vmatpush1.xpose.msra.mxu0 0.0
        %335 = vmatprep.subr.mxu0 0.0
        %336 = vmatpush1.xpose.msra.mxu0 0.0
        %337 = vmatprep.subr.mxu0 0.0
        %338 = vmatpush1.xpose.msra.mxu0 0.0
        %339 = vmatprep.subr.mxu0 0.0
        %340 = vmatpush1.xpose.msra.mxu0 0.0
        %341 = vmatprep.subr.mxu0 0.0
        %342 = vmatpush1.xpose.msra.mxu0 0.0
        %343 = vmatprep.subr.mxu0 0.0
        %344 = vmatpush1.xpose.msra.mxu0 0.0
        %345 = vmatprep.subr.mxu0 0.0
        %346 = vmatpush1.xpose.msra.mxu0 0.0
        %347 = vmatprep.subr.mxu0 0.0
        %348 = vmatpush1.xpose.msra.mxu0 0.0
        %349 = vmatprep.subr.mxu0 0.0
        %350 = vmatpush1.xpose.msra.mxu0 0.0
        %351 = vmatprep.subr.mxu0 0.0
        %352 = vmatpush1.xpose.msra.mxu0 0.0
        %353 = vmatprep.subr.mxu0 0.0
        %354 = vmatpush1.xpose.msra.mxu0 0.0
        %355 = vmatprep.subr.mxu0 0.0
        %356 = vmatpush1.xpose.msra.mxu0 0.0
        %357 = vmatprep.subr.mxu0 0.0
        %358 = vmatpush1.xpose.msra.mxu0 0.0
        %359 = vmatprep.subr.mxu0 0.0
        %360 = vmatpush1.xpose.msra.mxu0 0.0
        %361 = vmatprep.subr.mxu0 0.0
        %362 = vmatpush1.xpose.msra.mxu0 0.0
        %363 = vmatprep.subr.mxu0 0.0
        %364 = vmatpush1.xpose.msra.mxu0 0.0
        %365 = vmatprep.subr.mxu0 0.0
        %366 = vmatpush1.xpose.msra.mxu0 0.0
        %367 = vmatprep.subr.mxu0 0.0
        %368 = vmatpush1.xpose.msra.mxu0 0.0
        %369 = vmatprep.subr.mxu0 0.0
        %370 = vmatpush1.xpose.msra.mxu0 0.0
        %371 = vmatprep.subr.mxu0 0.0
        %372 = vmatpush1.xpose.msra.mxu0 0.0
        %373 = vmatprep.subr.mxu0 0.0
        %374 = vmatpush1.xpose.msra.mxu0 0.0
        %375 = vmatprep.subr.mxu0 0.0
        %376 = vmatpush1.xpose.msra.mxu0 0.0
        %377 = vmatprep.mubr.f32.mxu0 0.0
        %378 = vmatmul.mubr.f32.gmra.mrb[0].mxu0 %v308
        %v379 = vpop.f32.mrb[0].mxu0
        %v380 = vadd.f32 0.0, %v379
        %v381 = vpop.f32.mrb[0].mxu0
        %382 = vdwg.mxu0
        %v383 = vld [vmem:[#allocation2] sm:$0xff]
        %v384 = vsel %vm306, %v380, -inf
        %385 = vmax.xlane.f32.xlu0 %v384
        %v386 = vpop.xlane.xlu0 %385
        %v387 = vmax.f32 %v383, %v386
        %v388 = vsub.f32 %v383, %v387
        %v389 = vmul.f32 %v388, 1.442695
        %v390 = vpow.pop %v389
        %392 = vset.pattern.permute.xlu0 0
        %393 = vperm.xlu0 %392, %v387
        %v394 = vpop.permute.xlu0 %393
        %v396 = vsub.f32 %v380, %v394
        %v397 = vmul.f32 %v396, 1.442695
        %v398 = vpow.pop %v397
        %v399 = vld [vmem:[#allocation3] sm:$0xff]
        %v400 = vmul.f32 %v390, %v399
        %v401 = vsel %vm306, %v398, 0.0
        %402 = vadd.xlane.f32.xlu0 %v401
        %v403 = vpop.xlane.xlu0 %402
        %v404 = vadd.f32 %v400, %v403
        %vm405 = vcmask 7168
        %406 = vst.msk [vmem:[#allocation3] sm:$0xff] %vm405, %v404
        %v407 = vld [vmem:[#allocation4] sm:$0xff]
        %409 = vset.pattern.permute.xlu0 0
        %410 = vperm.xlu0 %409, %v390
        %v411 = vpop.permute.xlu0 %410
        %v413 = vmul.f32 %v411, %v407
        %v415 = vsel %vm306, %v398, 0
        %417 = vmatprep.subr.mxu0 0.0
        %418 = vmatpush1.msra.mxu0 %v305
        %419 = vmatprep.subr.mxu0 0.0
        %420 = vmatpush1.msra.mxu0 0.0
        %421 = vmatprep.subr.mxu0 0.0
        %422 = vmatpush1.msra.mxu0 0.0
        %423 = vmatprep.subr.mxu0 0.0
        %424 = vmatpush1.msra.mxu0 0.0
        %425 = vmatprep.subr.mxu0 0.0
        %426 = vmatpush1.msra.mxu0 0.0
        %427 = vmatprep.subr.mxu0 0.0
        %428 = vmatpush1.msra.mxu0 0.0
        %429 = vmatprep.subr.mxu0 0.0
        %430 = vmatpush1.msra.mxu0 0.0
        %431 = vmatprep.subr.mxu0 0.0
        %432 = vmatpush1.msra.mxu0 0.0
        %433 = vmatprep.subr.mxu0 0.0
        %434 = vmatpush1.msra.mxu0 0.0
        %435 = vmatprep.subr.mxu0 0.0
        %436 = vmatpush1.msra.mxu0 0.0
        %437 = vmatprep.subr.mxu0 0.0
        %438 = vmatpush1.msra.mxu0 0.0
        %439 = vmatprep.subr.mxu0 0.0
        %440 = vmatpush1.msra.mxu0 0.0
        %441 = vmatprep.subr.mxu0 0.0
        %442 = vmatpush1.msra.mxu0 0.0
        %443 = vmatprep.subr.mxu0 0.0
        %444 = vmatpush1.msra.mxu0 0.0
        %445 = vmatprep.subr.mxu0 0.0
        %446 = vmatpush1.msra.mxu0 0.0
        %447 = vmatprep.subr.mxu0 0.0
        %448 = vmatpush1.msra.mxu0 0.0
        %449 = vmatprep.subr.mxu0 0.0
        %450 = vmatpush1.msra.mxu0 0.0
        %451 = vmatprep.subr.mxu0 0.0
        %452 = vmatpush1.msra.mxu0 0.0
        %453 = vmatprep.subr.mxu0 0.0
        %454 = vmatpush1.msra.mxu0 0.0
        %455 = vmatprep.subr.mxu0 0.0
        %456 = vmatpush1.msra.mxu0 0.0
        %457 = vmatprep.subr.mxu0 0.0
        %458 = vmatpush1.msra.mxu0 0.0
        %459 = vmatprep.subr.mxu0 0.0
        %460 = vmatpush1.msra.mxu0 0.0
        %461 = vmatprep.subr.mxu0 0.0
        %462 = vmatpush1.msra.mxu0 0.0
        %463 = vmatprep.subr.mxu0 0.0
        %464 = vmatpush1.msra.mxu0 0.0
        %465 = vmatprep.subr.mxu0 0.0
        %466 = vmatpush1.msra.mxu0 0.0
        %467 = vmatprep.subr.mxu0 0.0
        %468 = vmatpush1.msra.mxu0 0.0
        %469 = vmatprep.subr.mxu0 0.0
        %470 = vmatpush1.msra.mxu0 0.0
        %471 = vmatprep.subr.mxu0 0.0
        %472 = vmatpush1.msra.mxu0 0.0
        %473 = vmatprep.subr.mxu0 0.0
        %474 = vmatpush1.msra.mxu0 0.0
        %475 = vmatprep.subr.mxu0 0.0
        %476 = vmatpush1.msra.mxu0 0.0
        %477 = vmatprep.subr.mxu0 0.0
        %478 = vmatpush1.msra.mxu0 0.0
        %479 = vmatprep.subr.mxu0 0.0
        %480 = vmatpush1.msra.mxu0 0.0
        %481 = vmatprep.mubr.f32.mxu0 0.0
        %482 = vmatmul.mubr.f32.gmra.mrb[0].mxu0 %v415
        %v483 = vpop.f32.mrb[0].mxu0
        %v484 = vadd.f32 0.0, %v483
        %v485 = vpop.f32.mrb[0].mxu0
        %486 = vdwg.mxu0
        %v487 = vadd.f32 %v413, %v484
        %488 = vst.msk [vmem:[#allocation4] sm:$0xff] %vm306, %v487
        %489 = vst.msk [vmem:[#allocation2] sm:$0xff] %vm405, %v387
        %490 = vrot.lane.b32.xlu0 %v303, 120
        %v491 = vpop.permute.xlu0 %490
        %492 = vrot.lane.b32.xlu0 %v304, 120
        %v493 = vpop.permute.xlu0 %492
        %v494 = vsel %vm306, %v491, 0
        %v496 = vsel %vm306, %v493, 0
        %498 = vmatprep.subr.mxu0 0.0
        %499 = vmatpush1.xpose.msra.mxu0 %v496
        %500 = vmatprep.subr.mxu0 0.0
        %501 = vmatpush1.xpose.msra.mxu0 0.0
        %502 = vmatprep.subr.mxu0 0.0
        %503 = vmatpush1.xpose.msra.mxu0 0.0
        %504 = vmatprep.subr.mxu0 0.0
        %505 = vmatpush1.xpose.msra.mxu0 0.0
        %506 = vmatprep.subr.mxu0 0.0
        %507 = vmatpush1.xpose.msra.mxu0 0.0
        %508 = vmatprep.subr.mxu0 0.0
        %509 = vmatpush1.xpose.msra.mxu0 0.0
        %510 = vmatprep.subr.mxu0 0.0
        %511 = vmatpush1.xpose.msra.mxu0 0.0
        %512 = vmatprep.subr.mxu0 0.0
        %513 = vmatpush1.xpose.msra.mxu0 0.0
        %514 = vmatprep.subr.mxu0 0.0
        %515 = vmatpush1.xpose.msra.mxu0 0.0
        %516 = vmatprep.subr.mxu0 0.0
        %517 = vmatpush1.xpose.msra.mxu0 0.0
        %518 = vmatprep.subr.mxu0 0.0
        %519 = vmatpush1.xpose.msra.mxu0 0.0
        %520 = vmatprep.subr.mxu0 0.0
        %521 = vmatpush1.xpose.msra.mxu0 0.0
        %522 = vmatprep.subr.mxu0 0.0
        %523 = vmatpush1.xpose.msra.mxu0 0.0
        %524 = vmatprep.subr.mxu0 0.0
        %525 = vmatpush1.xpose.msra.mxu0 0.0
        %526 = vmatprep.subr.mxu0 0.0
        %527 = vmatpush1.xpose.msra.mxu0 0.0
        %528 = vmatprep.subr.mxu0 0.0
        %529 = vmatpush1.xpose.msra.mxu0 0.0
        %530 = vmatprep.subr.mxu0 0.0
        %531 = vmatpush1.xpose.msra.mxu0 0.0
        %532 = vmatprep.subr.mxu0 0.0
        %533 = vmatpush1.xpose.msra.mxu0 0.0
        %534 = vmatprep.subr.mxu0 0.0
        %535 = vmatpush1.xpose.msra.mxu0 0.0
        %536 = vmatprep.subr.mxu0 0.0
        %537 = vmatpush1.xpose.msra.mxu0 0.0
        %538 = vmatprep.subr.mxu0 0.0
        %539 = vmatpush1.xpose.msra.mxu0 0.0
        %540 = vmatprep.subr.mxu0 0.0
        %541 = vmatpush1.xpose.msra.mxu0 0.0
        %542 = vmatprep.subr.mxu0 0.0
        %543 = vmatpush1.xpose.msra.mxu0 0.0
        %544 = vmatprep.subr.mxu0 0.0
        %545 = vmatpush1.xpose.msra.mxu0 0.0
        %546 = vmatprep.subr.mxu0 0.0
        %547 = vmatpush1.xpose.msra.mxu0 0.0
        %548 = vmatprep.subr.mxu0 0.0
        %549 = vmatpush1.xpose.msra.mxu0 0.0
        %550 = vmatprep.subr.mxu0 0.0
        %551 = vmatpush1.xpose.msra.mxu0 0.0
        %552 = vmatprep.subr.mxu0 0.0
        %553 = vmatpush1.xpose.msra.mxu0 0.0
        %554 = vmatprep.subr.mxu0 0.0
        %555 = vmatpush1.xpose.msra.mxu0 0.0
        %556 = vmatprep.subr.mxu0 0.0
        %557 = vmatpush1.xpose.msra.mxu0 0.0
        %558 = vmatprep.subr.mxu0 0.0
        %559 = vmatpush1.xpose.msra.mxu0 0.0
        %560 = vmatprep.subr.mxu0 0.0
        %561 = vmatpush1.xpose.msra.mxu0 0.0
        %562 = vmatprep.mubr.f32.mxu0 0.0
        %563 = vmatmul.mubr.f32.gmra.mrb[0].mxu0 %v494
        %v564 = vpop.f32.mrb[0].mxu0
        %v565 = vadd.f32 0.0, %v564
        %v566 = vpop.f32.mrb[0].mxu0
        %567 = vdwg.mxu0
        %s568 = scalar_lea.vmem [#allocation2], 8
        %v569 = vld [vmem:[%s568] sm:$0xff]
        %v570 = vsel %vm306, %v565, -inf
        %571 = vmax.xlane.f32.xlu0 %v570
        %v572 = vpop.xlane.xlu0 %571
        %v573 = vmax.f32 %v569, %v572
        %v574 = vsub.f32 %v569, %v573
        %v575 = vmul.f32 %v574, 1.442695
        %v576 = vpow.pop %v575
        %578 = vset.pattern.permute.xlu0 0
        %579 = vperm.xlu0 %578, %v573
        %v580 = vpop.permute.xlu0 %579
        %v582 = vsub.f32 %v565, %v580
        %v583 = vmul.f32 %v582, 1.442695
        %v584 = vpow.pop %v583
        %s585 = scalar_lea.vmem [#allocation3], 8
        %v586 = vld [vmem:[%s585] sm:$0xff]
        %v587 = vmul.f32 %v576, %v586
        %v588 = vsel %vm306, %v584, 0.0
        %589 = vadd.xlane.f32.xlu0 %v588
        %v590 = vpop.xlane.xlu0 %589
        %v591 = vadd.f32 %v587, %v590
        %592 = vst.msk [vmem:[%s585] sm:$0xff] %vm405, %v591
        %v593 = vld [vmem:[#allocation4] sm:$0xff]
        %595 = vset.pattern.permute.xlu0 0
        %596 = vperm.xlu0 %595, %v576
        %v597 = vpop.permute.xlu0 %596
        %v599 = vmul.f32 %v597, %v593
        %601 = vrot.lane.b32.xlu0 %v305, 120
        %v602 = vpop.permute.xlu0 %601
        %v605 = vsel %vm306, %v584, 0
        %607 = vmatprep.subr.mxu0 0.0
        %608 = vmatpush1.msra.mxu0 %v602
        %609 = vmatprep.subr.mxu0 0.0
        %610 = vmatpush1.msra.mxu0 0.0
        %611 = vmatprep.subr.mxu0 0.0
        %612 = vmatpush1.msra.mxu0 0.0
        %613 = vmatprep.subr.mxu0 0.0
        %614 = vmatpush1.msra.mxu0 0.0
        %615 = vmatprep.subr.mxu0 0.0
        %616 = vmatpush1.msra.mxu0 0.0
        %617 = vmatprep.subr.mxu0 0.0
        %618 = vmatpush1.msra.mxu0 0.0
        %619 = vmatprep.subr.mxu0 0.0
        %620 = vmatpush1.msra.mxu0 0.0
        %621 = vmatprep.subr.mxu0 0.0
        %622 = vmatpush1.msra.mxu0 0.0
        %623 = vmatprep.subr.mxu0 0.0
        %624 = vmatpush1.msra.mxu0 0.0
        %625 = vmatprep.subr.mxu0 0.0
        %626 = vmatpush1.msra.mxu0 0.0
        %627 = vmatprep.subr.mxu0 0.0
        %628 = vmatpush1.msra.mxu0 0.0
        %629 = vmatprep.subr.mxu0 0.0
        %630 = vmatpush1.msra.mxu0 0.0
        %631 = vmatprep.subr.mxu0 0.0
        %632 = vmatpush1.msra.mxu0 0.0
        %633 = vmatprep.subr.mxu0 0.0
        %634 = vmatpush1.msra.mxu0 0.0
        %635 = vmatprep.subr.mxu0 0.0
        %636 = vmatpush1.msra.mxu0 0.0
        %637 = vmatprep.subr.mxu0 0.0
        %638 = vmatpush1.msra.mxu0 0.0
        %639 = vmatprep.subr.mxu0 0.0
        %640 = vmatpush1.msra.mxu0 0.0
        %641 = vmatprep.subr.mxu0 0.0
        %642 = vmatpush1.msra.mxu0 0.0
        %643 = vmatprep.subr.mxu0 0.0
        %644 = vmatpush1.msra.mxu0 0.0
        %645 = vmatprep.subr.mxu0 0.0
        %646 = vmatpush1.msra.mxu0 0.0
        %647 = vmatprep.subr.mxu0 0.0
        %648 = vmatpush1.msra.mxu0 0.0
        %649 = vmatprep.subr.mxu0 0.0
        %650 = vmatpush1.msra.mxu0 0.0
        %651 = vmatprep.subr.mxu0 0.0
        %652 = vmatpush1.msra.mxu0 0.0
        %653 = vmatprep.subr.mxu0 0.0
        %654 = vmatpush1.msra.mxu0 0.0
        %655 = vmatprep.subr.mxu0 0.0
        %656 = vmatpush1.msra.mxu0 0.0
        %657 = vmatprep.subr.mxu0 0.0
        %658 = vmatpush1.msra.mxu0 0.0
        %659 = vmatprep.subr.mxu0 0.0
        %660 = vmatpush1.msra.mxu0 0.0
        %661 = vmatprep.subr.mxu0 0.0
        %662 = vmatpush1.msra.mxu0 0.0
        %663 = vmatprep.subr.mxu0 0.0
        %664 = vmatpush1.msra.mxu0 0.0
        %665 = vmatprep.subr.mxu0 0.0
        %666 = vmatpush1.msra.mxu0 0.0
        %667 = vmatprep.subr.mxu0 0.0
        %668 = vmatpush1.msra.mxu0 0.0
        %669 = vmatprep.subr.mxu0 0.0
        %670 = vmatpush1.msra.mxu0 0.0
        %671 = vmatprep.mubr.f32.mxu0 0.0
        %672 = vmatmul.mubr.f32.gmra.mrb[0].mxu0 %v605
        %v673 = vpop.f32.mrb[0].mxu0
        %v674 = vadd.f32 0.0, %v673
        %v675 = vpop.f32.mrb[0].mxu0
        %676 = vdwg.mxu0
        %678 = vrot.lane.b32.xlu0 %v674, 8
        %v679 = vpop.permute.xlu0 %678
        %v681 = vadd.f32 %v599, %v679
        %vm682 = vcmask 130112
        %683 = vst.msk [vmem:[#allocation4] sm:$0xff] %vm682, %v681
        %684 = vst.msk [vmem:[%s568] sm:$0xff] %vm405, %v573
        %685 = vrot.lane.b32.xlu0 %v303, 112
        %v686 = vpop.permute.xlu0 %685
        %687 = vrot.lane.b32.xlu0 %v304, 112
        %v688 = vpop.permute.xlu0 %687
        %v689 = vsel %vm306, %v686, 0
        %v691 = vsel %vm306, %v688, 0
        %693 = vmatprep.subr.mxu0 0.0
        %694 = vmatpush1.xpose.msra.mxu0 %v691
        %695 = vmatprep.subr.mxu0 0.0
        %696 = vmatpush1.xpose.msra.mxu0 0.0
        %697 = vmatprep.subr.mxu0 0.0
        %698 = vmatpush1.xpose.msra.mxu0 0.0
        %699 = vmatprep.subr.mxu0 0.0
        %700 = vmatpush1.xpose.msra.mxu0 0.0
        %701 = vmatprep.subr.mxu0 0.0
        %702 = vmatpush1.xpose.msra.mxu0 0.0
        %703 = vmatprep.subr.mxu0 0.0
        %704 = vmatpush1.xpose.msra.mxu0 0.0
        %705 = vmatprep.subr.mxu0 0.0
        %706 = vmatpush1.xpose.msra.mxu0 0.0
        %707 = vmatprep.subr.mxu0 0.0
        %708 = vmatpush1.xpose.msra.mxu0 0.0
        %709 = vmatprep.subr.mxu0 0.0
        %710 = vmatpush1.xpose.msra.mxu0 0.0
        %711 = vmatprep.subr.mxu0 0.0
        %712 = vmatpush1.xpose.msra.mxu0 0.0
        %713 = vmatprep.subr.mxu0 0.0
        %714 = vmatpush1.xpose.msra.mxu0 0.0
        %715 = vmatprep.subr.mxu0 0.0
        %716 = vmatpush1.xpose.msra.mxu0 0.0
        %717 = vmatprep.subr.mxu0 0.0
        %718 = vmatpush1.xpose.msra.mxu0 0.0
        %719 = vmatprep.subr.mxu0 0.0
        %720 = vmatpush1.xpose.msra.mxu0 0.0
        %721 = vmatprep.subr.mxu0 0.0
        %722 = vmatpush1.xpose.msra.mxu0 0.0
        %723 = vmatprep.subr.mxu0 0.0
        %724 = vmatpush1.xpose.msra.mxu0 0.0
        %725 = vmatprep.subr.mxu0 0.0
        %726 = vmatpush1.xpose.msra.mxu0 0.0
        %727 = vmatprep.subr.mxu0 0.0
        %728 = vmatpush1.xpose.msra.mxu0 0.0
        %729 = vmatprep.subr.mxu0 0.0
        %730 = vmatpush1.xpose.msra.mxu0 0.0
        %731 = vmatprep.subr.mxu0 0.0
        %732 = vmatpush1.xpose.msra.mxu0 0.0
        %733 = vmatprep.subr.mxu0 0.0
        %734 = vmatpush1.xpose.msra.mxu0 0.0
        %735 = vmatprep.subr.mxu0 0.0
        %736 = vmatpush1.xpose.msra.mxu0 0.0
        %737 = vmatprep.subr.mxu0 0.0
        %738 = vmatpush1.xpose.msra.mxu0 0.0
        %739 = vmatprep.subr.mxu0 0.0
        %740 = vmatpush1.xpose.msra.mxu0 0.0
        %741 = vmatprep.subr.mxu0 0.0
        %742 = vmatpush1.xpose.msra.mxu0 0.0
        %743 = vmatprep.subr.mxu0 0.0
        %744 = vmatpush1.xpose.msra.mxu0 0.0
        %745 = vmatprep.subr.mxu0 0.0
        %746 = vmatpush1.xpose.msra.mxu0 0.0
        %747 = vmatprep.subr.mxu0 0.0
        %748 = vmatpush1.xpose.msra.mxu0 0.0
        %749 = vmatprep.subr.mxu0 0.0
        %750 = vmatpush1.xpose.msra.mxu0 0.0
        %751 = vmatprep.subr.mxu0 0.0
        %752 = vmatpush1.xpose.msra.mxu0 0.0
        %753 = vmatprep.subr.mxu0 0.0
        %754 = vmatpush1.xpose.msra.mxu0 0.0
        %755 = vmatprep.subr.mxu0 0.0
        %756 = vmatpush1.xpose.msra.mxu0 0.0
        %757 = vmatprep.mubr.f32.mxu0 0.0
        %758 = vmatmul.mubr.f32.gmra.mrb[0].mxu0 %v689
        %v759 = vpop.f32.mrb[0].mxu0
        %v760 = vadd.f32 0.0, %v759
        %v761 = vpop.f32.mrb[0].mxu0
        %762 = vdwg.mxu0
        %s763 = scalar_lea.vmem [#allocation2], 16
        %v764 = vld [vmem:[%s763] sm:$0xff]
        %v765 = vsel %vm306, %v760, -inf
        %766 = vmax.xlane.f32.xlu0 %v765
        %v767 = vpop.xlane.xlu0 %766
        %v768 = vmax.f32 %v764, %v767
        %v769 = vsub.f32 %v764, %v768
        %v770 = vmul.f32 %v769, 1.442695
        %v771 = vpow.pop %v770
        %773 = vset.pattern.permute.xlu0 0
        %774 = vperm.xlu0 %773, %v768
        %v775 = vpop.permute.xlu0 %774
        %v777 = vsub.f32 %v760, %v775
        %v778 = vmul.f32 %v777, 1.442695
        %v779 = vpow.pop %v778
        %s780 = scalar_lea.vmem [#allocation3], 16
        %v781 = vld [vmem:[%s780] sm:$0xff]
        %v782 = vmul.f32 %v771, %v781
        %v783 = vsel %vm306, %v779, 0.0
        %784 = vadd.xlane.f32.xlu0 %v783
        %v785 = vpop.xlane.xlu0 %784
        %v786 = vadd.f32 %v782, %v785
        %787 = vst.msk [vmem:[%s780] sm:$0xff] %vm405, %v786
        %v788 = vld [vmem:[#allocation4] sm:$0xff]
        %790 = vset.pattern.permute.xlu0 0
        %791 = vperm.xlu0 %790, %v771
        %v792 = vpop.permute.xlu0 %791
        %v794 = vmul.f32 %v792, %v788
        %795 = vrot.lane.b32.xlu0 %v305, 112
        %v796 = vpop.permute.xlu0 %795
        %v799 = vsel %vm306, %v779, 0
        %801 = vmatprep.subr.mxu0 0.0
        %802 = vmatpush1.msra.mxu0 %v796
        %803 = vmatprep.subr.mxu0 0.0
        %804 = vmatpush1.msra.mxu0 0.0
        %805 = vmatprep.subr.mxu0 0.0
        %806 = vmatpush1.msra.mxu0 0.0
        %807 = vmatprep.subr.mxu0 0.0
        %808 = vmatpush1.msra.mxu0 0.0
        %809 = vmatprep.subr.mxu0 0.0
        %810 = vmatpush1.msra.mxu0 0.0
        %811 = vmatprep.subr.mxu0 0.0
        %812 = vmatpush1.msra.mxu0 0.0
        %813 = vmatprep.subr.mxu0 0.0
        %814 = vmatpush1.msra.mxu0 0.0
        %815 = vmatprep.subr.mxu0 0.0
        %816 = vmatpush1.msra.mxu0 0.0
        %817 = vmatprep.subr.mxu0 0.0
        %818 = vmatpush1.msra.mxu0 0.0
        %819 = vmatprep.subr.mxu0 0.0
        %820 = vmatpush1.msra.mxu0 0.0
        %821 = vmatprep.subr.mxu0 0.0
        %822 = vmatpush1.msra.mxu0 0.0
        %823 = vmatprep.subr.mxu0 0.0
        %824 = vmatpush1.msra.mxu0 0.0
        %825 = vmatprep.subr.mxu0 0.0
        %826 = vmatpush1.msra.mxu0 0.0
        %827 = vmatprep.subr.mxu0 0.0
        %828 = vmatpush1.msra.mxu0 0.0
        %829 = vmatprep.subr.mxu0 0.0
        %830 = vmatpush1.msra.mxu0 0.0
        %831 = vmatprep.subr.mxu0 0.0
        %832 = vmatpush1.msra.mxu0 0.0
        %833 = vmatprep.subr.mxu0 0.0
        %834 = vmatpush1.msra.mxu0 0.0
        %835 = vmatprep.subr.mxu0 0.0
        %836 = vmatpush1.msra.mxu0 0.0
        %837 = vmatprep.subr.mxu0 0.0
        %838 = vmatpush1.msra.mxu0 0.0
        %839 = vmatprep.subr.mxu0 0.0
        %840 = vmatpush1.msra.mxu0 0.0
        %841 = vmatprep.subr.mxu0 0.0
        %842 = vmatpush1.msra.mxu0 0.0
        %843 = vmatprep.subr.mxu0 0.0
        %844 = vmatpush1.msra.mxu0 0.0
        %845 = vmatprep.subr.mxu0 0.0
        %846 = vmatpush1.msra.mxu0 0.0
        %847 = vmatprep.subr.mxu0 0.0
        %848 = vmatpush1.msra.mxu0 0.0
        %849 = vmatprep.subr.mxu0 0.0
        %850 = vmatpush1.msra.mxu0 0.0
        %851 = vmatprep.subr.mxu0 0.0
        %852 = vmatpush1.msra.mxu0 0.0
        %853 = vmatprep.subr.mxu0 0.0
        %854 = vmatpush1.msra.mxu0 0.0
        %855 = vmatprep.subr.mxu0 0.0
        %856 = vmatpush1.msra.mxu0 0.0
        %857 = vmatprep.subr.mxu0 0.0
        %858 = vmatpush1.msra.mxu0 0.0
        %859 = vmatprep.subr.mxu0 0.0
        %860 = vmatpush1.msra.mxu0 0.0
        %861 = vmatprep.subr.mxu0 0.0
        %862 = vmatpush1.msra.mxu0 0.0
        %863 = vmatprep.subr.mxu0 0.0
        %864 = vmatpush1.msra.mxu0 0.0
        %865 = vmatprep.mubr.f32.mxu0 0.0
        %866 = vmatmul.mubr.f32.gmra.mrb[0].mxu0 %v799
        %v867 = vpop.f32.mrb[0].mxu0
        %v868 = vadd.f32 0.0, %v867
        %v869 = vpop.f32.mrb[0].mxu0
        %870 = vdwg.mxu0
        %872 = vrot.lane.b32.xlu0 %v868, 16
        %v873 = vpop.permute.xlu0 %872
        %v875 = vadd.f32 %v794, %v873
        %vm876 = vcmask 195712
        %877 = vst.msk [vmem:[#allocation4] sm:$0xff] %vm876, %v875
        %878 = vst.msk [vmem:[%s763] sm:$0xff] %vm405, %v768
        %879 = vrot.lane.b32.xlu0 %v303, 104
        %v880 = vpop.permute.xlu0 %879
        %881 = vrot.lane.b32.xlu0 %v304, 104
        %v882 = vpop.permute.xlu0 %881
        %v883 = vsel %vm306, %v880, 0
        %v885 = vsel %vm306, %v882, 0
        %887 = vmatprep.subr.mxu0 0.0
        %888 = vmatpush1.xpose.msra.mxu0 %v885
        %889 = vmatprep.subr.mxu0 0.0
        %890 = vmatpush1.xpose.msra.mxu0 0.0
        %891 = vmatprep.subr.mxu0 0.0
        %892 = vmatpush1.xpose.msra.mxu0 0.0
        %893 = vmatprep.subr.mxu0 0.0
        %894 = vmatpush1.xpose.msra.mxu0 0.0
        %895 = vmatprep.subr.mxu0 0.0
        %896 = vmatpush1.xpose.msra.mxu0 0.0
        %897 = vmatprep.subr.mxu0 0.0
        %898 = vmatpush1.xpose.msra.mxu0 0.0
        %899 = vmatprep.subr.mxu0 0.0
        %900 = vmatpush1.xpose.msra.mxu0 0.0
        %901 = vmatprep.subr.mxu0 0.0
        %902 = vmatpush1.xpose.msra.mxu0 0.0
        %903 = vmatprep.subr.mxu0 0.0
        %904 = vmatpush1.xpose.msra.mxu0 0.0
        %905 = vmatprep.subr.mxu0 0.0
        %906 = vmatpush1.xpose.msra.mxu0 0.0
        %907 = vmatprep.subr.mxu0 0.0
        %908 = vmatpush1.xpose.msra.mxu0 0.0
        %909 = vmatprep.subr.mxu0 0.0
        %910 = vmatpush1.xpose.msra.mxu0 0.0
        %911 = vmatprep.subr.mxu0 0.0
        %912 = vmatpush1.xpose.msra.mxu0 0.0
        %913 = vmatprep.subr.mxu0 0.0
        %914 = vmatpush1.xpose.msra.mxu0 0.0
        %915 = vmatprep.subr.mxu0 0.0
        %916 = vmatpush1.xpose.msra.mxu0 0.0
        %917 = vmatprep.subr.mxu0 0.0
        %918 = vmatpush1.xpose.msra.mxu0 0.0
        %919 = vmatprep.subr.mxu0 0.0
        %920 = vmatpush1.xpose.msra.mxu0 0.0
        %921 = vmatprep.subr.mxu0 0.0
        %922 = vmatpush1.xpose.msra.mxu0 0.0
        %923 = vmatprep.subr.mxu0 0.0
        %924 = vmatpush1.xpose.msra.mxu0 0.0
        %925 = vmatprep.subr.mxu0 0.0
        %926 = vmatpush1.xpose.msra.mxu0 0.0
        %927 = vmatprep.subr.mxu0 0.0
        %928 = vmatpush1.xpose.msra.mxu0 0.0
        %929 = vmatprep.subr.mxu0 0.0
        %930 = vmatpush1.xpose.msra.mxu0 0.0
        %931 = vmatprep.subr.mxu0 0.0
        %932 = vmatpush1.xpose.msra.mxu0 0.0
        %933 = vmatprep.subr.mxu0 0.0
        %934 = vmatpush1.xpose.msra.mxu0 0.0
        %935 = vmatprep.subr.mxu0 0.0
        %936 = vmatpush1.xpose.msra.mxu0 0.0
        %937 = vmatprep.subr.mxu0 0.0
        %938 = vmatpush1.xpose.msra.mxu0 0.0
        %939 = vmatprep.subr.mxu0 0.0
        %940 = vmatpush1.xpose.msra.mxu0 0.0
        %941 = vmatprep.subr.mxu0 0.0
        %942 = vmatpush1.xpose.msra.mxu0 0.0
        %943 = vmatprep.subr.mxu0 0.0
        %944 = vmatpush1.xpose.msra.mxu0 0.0
        %945 = vmatprep.subr.mxu0 0.0
        %946 = vmatpush1.xpose.msra.mxu0 0.0
        %947 = vmatprep.subr.mxu0 0.0
        %948 = vmatpush1.xpose.msra.mxu0 0.0
        %949 = vmatprep.subr.mxu0 0.0
        %950 = vmatpush1.xpose.msra.mxu0 0.0
        %951 = vmatprep.mubr.f32.mxu0 0.0
        %952 = vmatmul.mubr.f32.gmra.mrb[0].mxu0 %v883
        %v953 = vpop.f32.mrb[0].mxu0
        %v954 = vadd.f32 0.0, %v953
        %v955 = vpop.f32.mrb[0].mxu0
        %956 = vdwg.mxu0
        %s957 = scalar_lea.vmem [#allocation2], 24
        %v958 = vld [vmem:[%s957] sm:$0xff]
        %v959 = vsel %vm306, %v954, -inf
        %960 = vmax.xlane.f32.xlu0 %v959
        %v961 = vpop.xlane.xlu0 %960
        %v962 = vmax.f32 %v958, %v961
        %v963 = vsub.f32 %v958, %v962
        %v964 = vmul.f32 %v963, 1.442695
        %v965 = vpow.pop %v964
        %967 = vset.pattern.permute.xlu0 0
        %968 = vperm.xlu0 %967, %v962
        %v969 = vpop.permute.xlu0 %968
        %v971 = vsub.f32 %v954, %v969
        %v972 = vmul.f32 %v971, 1.442695
        %v973 = vpow.pop %v972
        %s974 = scalar_lea.vmem [#allocation3], 24
        %v975 = vld [vmem:[%s974] sm:$0xff]
        %v976 = vmul.f32 %v965, %v975
        %v977 = vsel %vm306, %v973, 0.0
        %978 = vadd.xlane.f32.xlu0 %v977
        %v979 = vpop.xlane.xlu0 %978
        %v980 = vadd.f32 %v976, %v979
        %981 = vst.msk [vmem:[%s974] sm:$0xff] %vm405, %v980
        %v982 = vld [vmem:[#allocation4] sm:$0xff]
        %984 = vset.pattern.permute.xlu0 0
        %985 = vperm.xlu0 %984, %v965
        %v986 = vpop.permute.xlu0 %985
        %v988 = vmul.f32 %v986, %v982
        %989 = vrot.lane.b32.xlu0 %v305, 104
        %v990 = vpop.permute.xlu0 %989
        %v993 = vsel %vm306, %v973, 0
        %995 = vmatprep.subr.mxu0 0.0
        %996 = vmatpush1.msra.mxu0 %v990
        %997 = vmatprep.subr.mxu0 0.0
        %998 = vmatpush1.msra.mxu0 0.0
        %999 = vmatprep.subr.mxu0 0.0
        %1000 = vmatpush1.msra.mxu0 0.0
        %1001 = vmatprep.subr.mxu0 0.0
        %1002 = vmatpush1.msra.mxu0 0.0
        %1003 = vmatprep.subr.mxu0 0.0
        %1004 = vmatpush1.msra.mxu0 0.0
        %1005 = vmatprep.subr.mxu0 0.0
        %1006 = vmatpush1.msra.mxu0 0.0
        %1007 = vmatprep.subr.mxu0 0.0
        %1008 = vmatpush1.msra.mxu0 0.0
        %1009 = vmatprep.subr.mxu0 0.0
        %1010 = vmatpush1.msra.mxu0 0.0
        %1011 = vmatprep.subr.mxu0 0.0
        %1012 = vmatpush1.msra.mxu0 0.0
        %1013 = vmatprep.subr.mxu0 0.0
        %1014 = vmatpush1.msra.mxu0 0.0
        %1015 = vmatprep.subr.mxu0 0.0
        %1016 = vmatpush1.msra.mxu0 0.0
        %1017 = vmatprep.subr.mxu0 0.0
        %1018 = vmatpush1.msra.mxu0 0.0
        %1019 = vmatprep.subr.mxu0 0.0
        %1020 = vmatpush1.msra.mxu0 0.0
        %1021 = vmatprep.subr.mxu0 0.0
        %1022 = vmatpush1.msra.mxu0 0.0
        %1023 = vmatprep.subr.mxu0 0.0
        %1024 = vmatpush1.msra.mxu0 0.0
        %1025 = vmatprep.subr.mxu0 0.0
        %1026 = vmatpush1.msra.mxu0 0.0
        %1027 = vmatprep.subr.mxu0 0.0
        %1028 = vmatpush1.msra.mxu0 0.0
        %1029 = vmatprep.subr.mxu0 0.0
        %1030 = vmatpush1.msra.mxu0 0.0
        %1031 = vmatprep.subr.mxu0 0.0
        %1032 = vmatpush1.msra.mxu0 0.0
        %1033 = vmatprep.subr.mxu0 0.0
        %1034 = vmatpush1.msra.mxu0 0.0
        %1035 = vmatprep.subr.mxu0 0.0
        %1036 = vmatpush1.msra.mxu0 0.0
        %1037 = vmatprep.subr.mxu0 0.0
        %1038 = vmatpush1.msra.mxu0 0.0
        %1039 = vmatprep.subr.mxu0 0.0
        %1040 = vmatpush1.msra.mxu0 0.0
        %1041 = vmatprep.subr.mxu0 0.0
        %1042 = vmatpush1.msra.mxu0 0.0
        %1043 = vmatprep.subr.mxu0 0.0
        %1044 = vmatpush1.msra.mxu0 0.0
        %1045 = vmatprep.subr.mxu0 0.0
        %1046 = vmatpush1.msra.mxu0 0.0
        %1047 = vmatprep.subr.mxu0 0.0
        %1048 = vmatpush1.msra.mxu0 0.0
        %1049 = vmatprep.subr.mxu0 0.0
        %1050 = vmatpush1.msra.mxu0 0.0
        %1051 = vmatprep.subr.mxu0 0.0
        %1052 = vmatpush1.msra.mxu0 0.0
        %1053 = vmatprep.subr.mxu0 0.0
        %1054 = vmatpush1.msra.mxu0 0.0
        %1055 = vmatprep.subr.mxu0 0.0
        %1056 = vmatpush1.msra.mxu0 0.0
        %1057 = vmatprep.subr.mxu0 0.0
        %1058 = vmatpush1.msra.mxu0 0.0
        %1059 = vmatprep.mubr.f32.mxu0 0.0
        %1060 = vmatmul.mubr.f32.gmra.mrb[0].mxu0 %v993
        %v1061 = vpop.f32.mrb[0].mxu0
        %v1062 = vadd.f32 0.0, %v1061
        %v1063 = vpop.f32.mrb[0].mxu0
        %1064 = vdwg.mxu0
        %1066 = vrot.lane.b32.xlu0 %v1062, 24
        %v1067 = vpop.permute.xlu0 %1066
        %v1069 = vadd.f32 %v988, %v1067
        %vm1070 = vcmask 261312
        %1071 = vst.msk [vmem:[#allocation4] sm:$0xff] %vm1070, %v1069
        %1072 = vst.msk [vmem:[%s957] sm:$0xff] %vm405, %v962
        // Predicated region
        $region49: #{tpu_custom_call.1} parent=31 // pred_check
          %p1073 = pneg %p287
        $region50: #{tpu_custom_call.1} parent=31 // pred_check_branch
          %1075 = sbr.rel (%p1073) target = $region52
        $region51: #{tpu_custom_call.1} parent=31 // pred_region
          %v1076 = vld [vmem:[#allocation3] sm:$0xff]
          %v1077 = vrcp.pop %v1076
          %v1078 = vld [vmem:[#allocation4] sm:$0xff]
          %1080 = vset.pattern.permute.xlu0 0
          %1081 = vperm.xlu0 %1080, %v1077
          %v1082 = vpop.permute.xlu0 %1081
          %v1084 = vmul.f32 %v1078, %v1082
          %v1085 = vld [vmem:[%s585] sm:$0xff]
          %v1086 = vrcp.pop %v1085
          %1088 = vset.pattern.permute.xlu0 0
          %1089 = vperm.xlu0 %1088, %v1086
          %v1090 = vpop.permute.xlu0 %1089
          %v1092 = vmul.f32 %v1078, %v1090
          %v1093 = vld [vmem:[%s780] sm:$0xff]
          %v1094 = vrcp.pop %v1093
          %1096 = vset.pattern.permute.xlu0 0
          %1097 = vperm.xlu0 %1096, %v1094
          %v1098 = vpop.permute.xlu0 %1097
          %v1100 = vmul.f32 %v1078, %v1098
          %v1101 = vld [vmem:[%s974] sm:$0xff]
          %v1102 = vrcp.pop %v1101
          %1104 = vset.pattern.permute.xlu0 0
          %1105 = vperm.xlu0 %1104, %v1102
          %v1106 = vpop.permute.xlu0 %1105
          %v1108 = vmul.f32 %v1078, %v1106
          %v1109 = vsel %vm306, %v1084, %v1092
          %vm1110 = vcmask 130048
          %v1111 = vsel %vm1110, %v1109, %v1100
          %vm1112 = vcmask 195584
          %v1113 = vsel %vm1112, %v1111, %v1108
          %vm1114 = vcmask 261120
          %1115 = vst.msk [vmem:[%s286] sm:$0xff] %vm1114, %v1113
        $region52: #{tpu_custom_call.1} parent=31 // pred_fallthru
          _
        %s1116 = sand.u32 %s136, 1
        %s1117 = scalar_lea.sflag [#allocation7], %s1116
        %s1118 = sand.u32 %s136, 1
        %s1119 = smul.addr %s1118, 8
        %s1120 = scalar_lea.vmem [#allocation11], %s1119
        // Predicated region
        $region53: #{tpu_custom_call.1} parent=31 // pred_check
          %p1121 = pneg %p146
        $region54: #{tpu_custom_call.1} parent=31 // pred_check_branch
          %1123 = sbr.rel (%p1121) target = $region56
        $region55: #{tpu_custom_call.1} parent=31 // pred_region
          %s1125 = ssub.s32 128, 128
          %1126 = vsyncadd %s1117, %s1125
          %s1127 = sadd.s32 %s29, %s28
          %s1128 = smul.addr %s1127, 128
          %s1129 = scalar_lea.hbm %s3, %s1128
          %s1131 = sshll.u32 %s1120, 4
          %s1132 = int_to_ptr.vmem [resolvable:$true] %s1131
          %1134 = dma.vmem_to_hbm [thread:$0]  %s1132, 128, %s1129, %s1117
        $region56: #{tpu_custom_call.1} parent=31 // pred_fallthru
          _
      $region32: #{tpu_custom_call.1} parent=5 // pred_fallthru
        _
      %p1135 = scmp.le.s32.totalorder 2, %s18
      // Predicated region
      $region57: #{tpu_custom_call.1} parent=5 // pred_check
        %p1136 = pneg %p1135
      $region58: #{tpu_custom_call.1} parent=5 // pred_check_branch
        %1138 = sbr.rel (%p1136) target = $region60
      $region59: #{tpu_custom_call.1} parent=5 // pred_region
        %s1139 = ssub.s32 %s18, 2
        // Predicated region
        $region61: #{tpu_custom_call.1} parent=59 // pred_check
          %p1140 = pneg %p152
        $region62: #{tpu_custom_call.1} parent=59 // pred_check_branch
          %1142 = sbr.rel (%p1140) target = $region64
        $region63: #{tpu_custom_call.1} parent=59 // pred_region
          %s1143 = sand.u32 %s137, 1
          %s1144 = scalar_lea.sflag [#allocation7], %s1143
          %s1145 = sand.u32 %s137, 1
          %s1146 = smul.addr %s1145, 8
          %s1147 = scalar_lea.vmem [#allocation11], %s1146
          %1148 = dma.done %s1144, 128
        $region64: #{tpu_custom_call.1} parent=59 // pred_fallthru
          _
      $region60: #{tpu_custom_call.1} parent=5 // pred_fallthru
        _
    $region6: #{tpu_custom_call.1} parent=1 // loop_footer
      %s22 = sadd.s32 1, %s18
    $region7: #{tpu_custom_call.1} parent=1 // loop_footer_branch
      %17 = sbr.rel target = $region3
    $region8: #{tpu_custom_call.1} parent=1 // loop_exit
      _
    %1149 = vsyncpa [#allocation6], 1
    %s1150 = scalar_lea.sflag [#allocation6], 1
    %1151 = vsyncpa %s1150, 1
    %1152 = vsyncpa [#allocation9], 1
    %s1153 = scalar_lea.sflag [#allocation9], 1
    %1154 = vsyncpa %s1153, 1
    %1155 = vsyncpa [#allocation7], 1
    %s1156 = scalar_lea.sflag [#allocation7], 1
    %1157 = vsyncpa %s1156, 1

</llo_original>
